<compile_context>
chip_gen: v6e
topology: v6e:2x2x1
jax: 0.10.0
libtpu: 0.0.40
codegen_flags: <defaults>
</compile_context>

<pallas_src>
import functools

import jax
import jax.numpy as jnp
from jax.experimental import pallas as pl
from jax.experimental.pallas import tpu as pltpu


# ---------------------------------------------------------------------------
# Pallas kernel: whole encoding path for one (block_b, obs) tile of rows.
# ---------------------------------------------------------------------------
def _make_encoding_kernel(obs_p: int, D: int, w_offsets: tuple):
    """obs_p: padded obs width; D: padded (lane-dense) hidden width;
    w_offsets: static row offsets of the 8 packed weight matrices."""

    def kernel(x_ref, w_ref, b_ref, out_ref):
        act = lambda v: jnp.maximum(v, 0.0)  # ReLU
        f32 = jnp.float32

        def W(i):  # static (D, D) view of packed weight i (i >= 1)
            return w_ref[pl.ds(w_offsets[i], D), :]

        def B(i):  # (1, D) bias row, broadcast over the batch tile
            return b_ref[pl.ds(i, 1), :]

        x = x_ref[...]  # (block_b, obs_p)

        # ---- encoder ResidualMLP: obs -> D ---------------------------------
        ew_in = w_ref[pl.ds(w_offsets[0], obs_p), :]  # (obs_p, D)
        h = jnp.dot(x, ew_in, preferred_element_type=f32) + B(0)
        inner = act(jnp.dot(h, W(1), preferred_element_type=f32) + B(1))
        h = h + (jnp.dot(inner, W(2), preferred_element_type=f32) + B(2))
        h = jnp.dot(h, W(3), preferred_element_type=f32) + B(3)

        # ---- act_func(encoder(x)); task embedding is folded into B(4) ------
        h = act(h)

        # ---- shared ResidualMLP: D -> D (use_mlp = True) --------------------
        g = jnp.dot(h, W(4), preferred_element_type=f32) + B(4)
        inner2 = act(jnp.dot(g, W(5), preferred_element_type=f32) + B(5))
        g = g + (jnp.dot(inner2, W(6), preferred_element_type=f32) + B(6))
        g = jnp.dot(g, W(7), preferred_element_type=f32) + B(7)

        out_ref[...] = act(g)

    return kernel


# ---------------------------------------------------------------------------
# Host-side parameter packing: 2 contiguous, tile-aligned f32 buffers.
# ---------------------------------------------------------------------------
def _pack_params(enc_params, shared_params, task_embed_row, obs_p, D):
    ew_in, eb_in, ew1, eb1, ew2, eb2, ew_out, eb_out = enc_params
    sw_in, sb_in, sw1, sb1, sw2, sb2, sw_out, sb_out = shared_params

    def padw(w, rows):
        w = jnp.asarray(w, jnp.float32)
        r, c = w.shape
        return jnp.pad(w, ((0, rows - r), (0, D - c)))

    def padb(b):
        b = jnp.asarray(b, jnp.float32).reshape(1, -1)
        return jnp.pad(b, ((0, 0), (0, D - b.shape[-1])))

    # Fold the task embedding into the shared in-proj bias (exact: the ReLU
    # sits before the add).  Cache this per task in production.
    sb_in_folded = jnp.asarray(sb_in, jnp.float32).reshape(1, -1) + \
        jnp.asarray(task_embed_row, jnp.float32).reshape(1, -1) @ jnp.asarray(sw_in, jnp.float32)

    w_blocks = [padw(ew_in, obs_p)] + [
        padw(w, D) for w in (ew1, ew2, ew_out, sw_in, sw1, sw2, sw_out)
    ]
    offsets, o = [], 0
    for wb in w_blocks:
        offsets.append(o)
        o += wb.shape[0]
    w_packed = jnp.concatenate(w_blocks, axis=0)  # (obs_p + 7*D, D)

    b_packed = jnp.concatenate(
        [padb(b) for b in (eb_in, eb1, eb2, eb_out, sb_in_folded, sb1, sb2, sb_out)],
        axis=0,
    )  # (8, D) -> exactly one (8,128) tile when D == 128

    return w_packed, b_packed, tuple(offsets)


# ---------------------------------------------------------------------------
# Wrapper: batched grid over rows, weights resident in VMEM across the grid.
# ---------------------------------------------------------------------------
def specific_base_encoding(x, enc_params, task_embed_row, shared_params,
                           *, block_b: int = 128):
    orig_b, obs_dim = x.shape
    d_model = task_embed_row.shape[-1]
    f32 = jnp.float32

    D = pl.cdiv(d_model, 128) * 128            # lane-dense hidden width
    obs_p = pl.cdiv(obs_dim, 8) * 8            # sublane-aligned obs width
    b_pad = pl.cdiv(orig_b, block_b) * block_b  # batch padded to tile multiple

    x_p = jnp.zeros((b_pad, obs_p), f32).at[:orig_b, :obs_dim].set(x.astype(f32))

    w_packed, b_packed, offsets = _pack_params(
        enc_params, shared_params, task_embed_row, obs_p, D)

    kernel = _make_encoding_kernel(obs_p, D, offsets)

    out = pl.pallas_call(
        kernel,
        out_shape=jax.ShapeDtypeStruct((b_pad, D), f32),
        grid_spec=pltpu.PrefetchScalarGridSpec(
            num_scalar_prefetch=0,
            grid=(b_pad // block_b,),
            in_specs=[
                # x: tiled over the batch axis.
                pl.BlockSpec((block_b, obs_p), lambda i: (i, 0)),
                # packed weights / biases: constant block index -> loaded once,
                # kept resident in VMEM across all batch grid steps.
                pl.BlockSpec(w_packed.shape, lambda i: (0, 0)),
                pl.BlockSpec(b_packed.shape, lambda i: (0, 0)),
            ],
            out_specs=pl.BlockSpec((block_b, D), lambda i: (i, 0)),
        ),
        compiler_params=pltpu.CompilerParams(
            dimension_semantics=("parallel",),   # rows independent -> megacore
        ),
    )(x_p, w_packed, b_packed)

    return out[:orig_b, :d_model]


# ---------------------------------------------------------------------------
# Deterministic synthetic parameters (no checkpoint).
# ---------------------------------------------------------------------------
def make_residual_mlp_params(key, in_dim, d_model, out_dim):
    ks = jax.random.split(key, 8)
    s_in = 1.0 / jnp.sqrt(in_dim)
    s_h = 1.0 / jnp.sqrt(d_model)
    w_in = jax.random.normal(ks[0], (in_dim, d_model), jnp.float32) * s_in
    b_in = jax.random.normal(ks[1], (1, d_model), jnp.float32) * 0.1
    w1 = jax.random.normal(ks[2], (d_model, d_model), jnp.float32) * s_h
    b1 = jax.random.normal(ks[3], (1, d_model), jnp.float32) * 0.1
    w2 = jax.random.normal(ks[4], (d_model, d_model), jnp.float32) * s_h
    b2 = jax.random.normal(ks[5], (1, d_model), jnp.float32) * 0.1
    w_out = jax.random.normal(ks[6], (d_model, out_dim), jnp.float32) * s_h
    b_out = jax.random.normal(ks[7], (1, out_dim), jnp.float32) * 0.1
    return (w_in, b_in, w1, b1, w2, b2, w_out, b_out)


def reference_encoding(x, enc_params, task_embed_row, shared_params):
    """Pure-JAX reference with the exact module semantics."""
    act = lambda v: jnp.maximum(v, 0.0)

    def residual_mlp(h, p):
        w_in, b_in, w1, b1, w2, b2, w_out, b_out = p
        h = h @ w_in + b_in
        h = h + (act(h @ w1 + b1) @ w2 + b2)
        return h @ w_out + b_out

    h = act(residual_mlp(x, enc_params))
    h = h + task_embed_row
    h = act(residual_mlp(h, shared_params))
    return h


if __name__ == "__main__":
    key = jax.random.PRNGKey(0)
    k_x, k_enc, k_shared, k_emb = jax.random.split(key, 4)

    # Small shapes implied by the module (flat-obs ResidualMLP path), with
    # enough rows to exercise the batched grid (2 grid steps of 128 rows).
    B = 256        # batch of env rows
    obs_dim = 8    # env.observation_space.shape = (8,)  -> len < 2 branch
    d_model = 32   # cfg.nn.actor_critic.d_model
    num_tasks = 3  # len(env_ids)
    task_number = 1  # self.task_id_int_dict[env_id]

    x = jax.random.normal(k_x, (B, obs_dim), jnp.float32)

    enc_params = make_residual_mlp_params(k_enc, obs_dim, d_model, d_model)
    shared_params = make_residual_mlp_params(k_shared, d_model, d_model, d_model)

    # nn.Embedding(num_tasks, d_model) weight; select this call's task row.
    task_embedding_weight = jax.random.normal(
        k_emb, (num_tasks, d_model), jnp.float32)
    task_embed_row = task_embedding_weight[task_number][None, :]  # (1, d_model)

    out = specific_base_encoding(x, enc_params, task_embed_row, shared_params)
    out = jax.block_until_ready(out)

    ref = reference_encoding(x, enc_params, task_embed_row, shared_params)
    assert out.shape == (B, d_model)
    # Tolerance covers the (mathematically exact) task-embedding bias fold,
    # which reassociates one f32 matmul+add relative to the reference.
    max_err = float(jnp.max(jnp.abs(out - ref)))
    assert jnp.allclose(out, ref, atol=1e-3, rtol=1e-3), max_err

    print("KERNEL_OK")
</pallas_src>

<mosaic_0001>
module attributes {stable_mosaic.version = 11 : i64} {
  func.func @kernel(%arg0: i32, %arg1: memref<128x8xf32, #tpu.memory_space<vmem>>, %arg2: memref<904x128xf32, #tpu.memory_space<vmem>>, %arg3: memref<8x128xf32, #tpu.memory_space<vmem>>, %arg4: memref<128x128xf32, #tpu.memory_space<vmem>>) attributes {dimension_semantics = [#tpu.dimension_semantics<parallel>], iteration_bounds = array<i64: 2>, scalar_prefetch = 0 : i64, scratch_operands = 0 : i64, tpu.core_type = #tpu.core_type<tc>, window_params = [{transform_indices = @transform_0, window_bounds = array<i64: 128, 8>}, {pipeline_mode = #tpu.pipeline_mode<synchronous>, transform_indices = @transform_1, window_bounds = array<i64: 904, 128>}, {pipeline_mode = #tpu.pipeline_mode<synchronous>, transform_indices = @transform_2, window_bounds = array<i64: 8, 128>}, {transform_indices = @transform_3, window_bounds = array<i64: 128, 128>}]} {
    %c0 = arith.constant 0 : index
    %c0_0 = arith.constant 0 : index
    %0 = vector.load %arg1[%c0, %c0_0] : memref<128x8xf32, #tpu.memory_space<vmem>>, vector<128x8xf32>
    %c0_1 = arith.constant 0 : index
    %c0_2 = arith.constant 0 : index
    %1 = vector.load %arg2[%c0_1, %c0_2] : memref<904x128xf32, #tpu.memory_space<vmem>>, vector<8x128xf32>
    %cst = arith.constant dense<0.000000e+00> : vector<128x128xf32>
    %2 = tpu.matmul %0, %1, %cst {dimension_numbers = #tpu.dot_dimension_numbers<[1], [0], [0], [1], [0, 0, 1, 1], [], []>} : vector<128x8xf32>, vector<8x128xf32>, vector<128x128xf32> -> vector<128x128xf32>
    %c0_3 = arith.constant 0 : index
    %c0_4 = arith.constant 0 : index
    %3 = vector.load %arg3[%c0_3, %c0_4] : memref<8x128xf32, #tpu.memory_space<vmem>>, vector<1x128xf32>
    %4 = vector.broadcast %3 : vector<1x128xf32> to vector<128x128xf32>
    %5 = arith.addf %2, %4 : vector<128x128xf32>
    %c8 = arith.constant 8 : index
    %c0_5 = arith.constant 0 : index
    %6 = vector.load %arg2[%c8, %c0_5] : memref<904x128xf32, #tpu.memory_space<vmem>>, vector<128x128xf32>
    %cst_6 = arith.constant dense<0.000000e+00> : vector<128x128xf32>
    %7 = tpu.matmul %5, %6, %cst_6 {dimension_numbers = #tpu.dot_dimension_numbers<[1], [0], [0], [1], [0, 0, 1, 1], [], []>} : vector<128x128xf32>, vector<128x128xf32>, vector<128x128xf32> -> vector<128x128xf32>
    %c1 = arith.constant 1 : index
    %c0_7 = arith.constant 0 : index
    %8 = vector.load %arg3[%c1, %c0_7] : memref<8x128xf32, #tpu.memory_space<vmem>>, vector<1x128xf32>
    %9 = vector.broadcast %8 : vector<1x128xf32> to vector<128x128xf32>
    %10 = arith.addf %7, %9 : vector<128x128xf32>
    %cst_8 = arith.constant 0.000000e+00 : f32
    %11 = vector.broadcast %cst_8 : f32 to vector<128x128xf32>
    %12 = arith.maximumf %10, %11 : vector<128x128xf32>
    %c136 = arith.constant 136 : index
    %c0_9 = arith.constant 0 : index
    %13 = vector.load %arg2[%c136, %c0_9] : memref<904x128xf32, #tpu.memory_space<vmem>>, vector<128x128xf32>
    %cst_10 = arith.constant dense<0.000000e+00> : vector<128x128xf32>
    %14 = tpu.matmul %12, %13, %cst_10 {dimension_numbers = #tpu.dot_dimension_numbers<[1], [0], [0], [1], [0, 0, 1, 1], [], []>} : vector<128x128xf32>, vector<128x128xf32>, vector<128x128xf32> -> vector<128x128xf32>
    %c2 = arith.constant 2 : index
    %c0_11 = arith.constant 0 : index
    %15 = vector.load %arg3[%c2, %c0_11] : memref<8x128xf32, #tpu.memory_space<vmem>>, vector<1x128xf32>
    %16 = vector.broadcast %15 : vector<1x128xf32> to vector<128x128xf32>
    %17 = arith.addf %14, %16 : vector<128x128xf32>
    %18 = arith.addf %5, %17 : vector<128x128xf32>
    %c264 = arith.constant 264 : index
    %c0_12 = arith.constant 0 : index
    %19 = vector.load %arg2[%c264, %c0_12] : memref<904x128xf32, #tpu.memory_space<vmem>>, vector<128x128xf32>
    %cst_13 = arith.constant dense<0.000000e+00> : vector<128x128xf32>
    %20 = tpu.matmul %18, %19, %cst_13 {dimension_numbers = #tpu.dot_dimension_numbers<[1], [0], [0], [1], [0, 0, 1, 1], [], []>} : vector<128x128xf32>, vector<128x128xf32>, vector<128x128xf32> -> vector<128x128xf32>
    %c3 = arith.constant 3 : index
    %c0_14 = arith.constant 0 : index
    %21 = vector.load %arg3[%c3, %c0_14] : memref<8x128xf32, #tpu.memory_space<vmem>>, vector<1x128xf32>
    %22 = vector.broadcast %21 : vector<1x128xf32> to vector<128x128xf32>
    %23 = arith.addf %20, %22 : vector<128x128xf32>
    %cst_15 = arith.constant 0.000000e+00 : f32
    %24 = vector.broadcast %cst_15 : f32 to vector<128x128xf32>
    %25 = arith.maximumf %23, %24 : vector<128x128xf32>
    %c392 = arith.constant 392 : index
    %c0_16 = arith.constant 0 : index
    %26 = vector.load %arg2[%c392, %c0_16] : memref<904x128xf32, #tpu.memory_space<vmem>>, vector<128x128xf32>
    %cst_17 = arith.constant dense<0.000000e+00> : vector<128x128xf32>
    %27 = tpu.matmul %25, %26, %cst_17 {dimension_numbers = #tpu.dot_dimension_numbers<[1], [0], [0], [1], [0, 0, 1, 1], [], []>} : vector<128x128xf32>, vector<128x128xf32>, vector<128x128xf32> -> vector<128x128xf32>
    %c4 = arith.constant 4 : index
    %c0_18 = arith.constant 0 : index
    %28 = vector.load %arg3[%c4, %c0_18] : memref<8x128xf32, #tpu.memory_space<vmem>>, vector<1x128xf32>
    %29 = vector.broadcast %28 : vector<1x128xf32> to vector<128x128xf32>
    %30 = arith.addf %27, %29 : vector<128x128xf32>
    %c520 = arith.constant 520 : index
    %c0_19 = arith.constant 0 : index
    %31 = vector.load %arg2[%c520, %c0_19] : memref<904x128xf32, #tpu.memory_space<vmem>>, vector<128x128xf32>
    %cst_20 = arith.constant dense<0.000000e+00> : vector<128x128xf32>
    %32 = tpu.matmul %30, %31, %cst_20 {dimension_numbers = #tpu.dot_dimension_numbers<[1], [0], [0], [1], [0, 0, 1, 1], [], []>} : vector<128x128xf32>, vector<128x128xf32>, vector<128x128xf32> -> vector<128x128xf32>
    %c5 = arith.constant 5 : index
    %c0_21 = arith.constant 0 : index
    %33 = vector.load %arg3[%c5, %c0_21] : memref<8x128xf32, #tpu.memory_space<vmem>>, vector<1x128xf32>
    %34 = vector.broadcast %33 : vector<1x128xf32> to vector<128x128xf32>
    %35 = arith.addf %32, %34 : vector<128x128xf32>
    %cst_22 = arith.constant 0.000000e+00 : f32
    %36 = vector.broadcast %cst_22 : f32 to vector<128x128xf32>
    %37 = arith.maximumf %35, %36 : vector<128x128xf32>
    %c648 = arith.constant 648 : index
    %c0_23 = arith.constant 0 : index
    %38 = vector.load %arg2[%c648, %c0_23] : memref<904x128xf32, #tpu.memory_space<vmem>>, vector<128x128xf32>
    %cst_24 = arith.constant dense<0.000000e+00> : vector<128x128xf32>
    %39 = tpu.matmul %37, %38, %cst_24 {dimension_numbers = #tpu.dot_dimension_numbers<[1], [0], [0], [1], [0, 0, 1, 1], [], []>} : vector<128x128xf32>, vector<128x128xf32>, vector<128x128xf32> -> vector<128x128xf32>
    %c6 = arith.constant 6 : index
    %c0_25 = arith.constant 0 : index
    %40 = vector.load %arg3[%c6, %c0_25] : memref<8x128xf32, #tpu.memory_space<vmem>>, vector<1x128xf32>
    %41 = vector.broadcast %40 : vector<1x128xf32> to vector<128x128xf32>
    %42 = arith.addf %39, %41 : vector<128x128xf32>
    %43 = arith.addf %30, %42 : vector<128x128xf32>
    %c776 = arith.constant 776 : index
    %c0_26 = arith.constant 0 : index
    %44 = vector.load %arg2[%c776, %c0_26] : memref<904x128xf32, #tpu.memory_space<vmem>>, vector<128x128xf32>
    %cst_27 = arith.constant dense<0.000000e+00> : vector<128x128xf32>
    %45 = tpu.matmul %43, %44, %cst_27 {dimension_numbers = #tpu.dot_dimension_numbers<[1], [0], [0], [1], [0, 0, 1, 1], [], []>} : vector<128x128xf32>, vector<128x128xf32>, vector<128x128xf32> -> vector<128x128xf32>
    %c7 = arith.constant 7 : index
    %c0_28 = arith.constant 0 : index
    %46 = vector.load %arg3[%c7, %c0_28] : memref<8x128xf32, #tpu.memory_space<vmem>>, vector<1x128xf32>
    %47 = vector.broadcast %46 : vector<1x128xf32> to vector<128x128xf32>
    %48 = arith.addf %45, %47 : vector<128x128xf32>
    %cst_29 = arith.constant 0.000000e+00 : f32
    %49 = vector.broadcast %cst_29 : f32 to vector<128x128xf32>
    %50 = arith.maximumf %48, %49 : vector<128x128xf32>
    %c0_30 = arith.constant 0 : index
    %c0_31 = arith.constant 0 : index
    %51 = vector.load %arg4[%c0_30, %c0_31] : memref<128x128xf32, #tpu.memory_space<vmem>>, vector<128x128xf32>
    tpu.vector_store %arg4[%c0_30, %c0_31], %50 {strides = array<i32>} : memref<128x128xf32, #tpu.memory_space<vmem>>, vector<128x128xf32>,
    return
  }
  func.func @transform_0(%arg0: i32) -> (i32, i32) {
    %c0_i32 = arith.constant 0 : i32
    %c0_i32_0 = arith.constant 0 : i32
    return %arg0, %c0_i32 : i32, i32
  }
  func.func @transform_1(%arg0: i32) -> (i32, i32) {
    %c0_i32 = arith.constant 0 : i32
    %c0_i32_0 = arith.constant 0 : i32
    %c0_i32_1 = arith.constant 0 : i32
    return %c0_i32, %c0_i32_0 : i32, i32
  }
  func.func @transform_2(%arg0: i32) -> (i32, i32) {
    %c0_i32 = arith.constant 0 : i32
    %c0_i32_0 = arith.constant 0 : i32
    %c0_i32_1 = arith.constant 0 : i32
    return %c0_i32, %c0_i32_0 : i32, i32
  }
  func.func @transform_3(%arg0: i32) -> (i32, i32) {
    %c0_i32 = arith.constant 0 : i32
    %c0_i32_0 = arith.constant 0 : i32
    return %arg0, %c0_i32 : i32, i32
  }
}

</mosaic_0001>

<llo_original>
// kernel: tpu_custom_call.1
$region0: #{tpu_custom_call.1}
  #allocation0 [shape = 'u32[]', space=smem, size = 0x4, offset = 0x4, fixed_abs, tag = 'smem constant byte address 0x4 - core index']
  #allocation1 [shape = 'u32[144,128]{1,0:T(1,128)}', space=vmem, size = 0x12000, scoped, tag = 'internal scratch']
  %s0 = inlined_call_operand.vmem [shape: f32[256,8], index: 0, kind: input, shape index: {}]
  %s1 = inlined_call_operand.hbm [shape: f32[904,128], index: 1, kind: input, shape index: {}]
  %s2 = inlined_call_operand.vmem [shape: f32[8,128], index: 2, kind: input, shape index: {}]
  %s3 = inlined_call_operand.hbm [shape: f32[256,128], index: 3, kind: output, shape index: {}]
  %s4 = sld [smem:[#allocation0]]
  $region49: #{tpu_custom_call.1} parent=0
    _
  %s6 = ssub.s32 1, %s4
  %s7 = scalar_select 0, %s6, %s4
  $region1: #{tpu_custom_call.1} parent=0
    #allocation2 [shape = 'u8[462848]{0}', space=vmem, size = 0x71000, scoped, tag = 'input window, operand 1, single buffered']
    #allocation3 [shape = 's32[2]{0}', space=sflag, size = 0x8, scoped, tag = 'scoped memory for tpu_custom_call.1']
    #allocation4 [shape = 's32[2]{0}', space=sflag, size = 0x8, scoped, tag = 'scoped memory for tpu_custom_call.1']
    #allocation5 [shape = 'u8[131072]{0}', space=vmem, size = 0x20000, scoped, tag = 'output window, operand 0']
    %8 = vsyncpa [#allocation3], 0
    %9 = vsyncpa [#allocation4], 0
    %s10 = scalar_lea.sflag [#allocation4], 1
    %11 = vsyncpa %s10, 0
    loop: start=0, step=1, limit=4
    $region2: #{tpu_custom_call.1} parent=1 // loop_pre_header
      _
    $region3: #{tpu_custom_call.1} parent=1 // loop_header
      %s13 = sphi 0, %s17
      %p14 = scmp.ge.s32.totalorder %s13, 4
      %s23 = sphi 0, %s25
      %s26 = sphi 0, %s23
      %s27 = sphi 0, %s26
      %s43 = sphi 0, %s27
      %s47 = sphi 0, %s47
      %s49 = sphi 0, %s47
      %s50 = sphi 0, %s49
      %s64 = sphi 0, %s50
      %s68 = sphi 0, %s68
      %s70 = sphi 0, %s68
      %s71 = sphi 0, %s70
      %s85 = sphi 0, %s71
      %s91 = sphi 0, %s93
      %s94 = sphi 0, %s91
      %s95 = sphi 0, %s94
      %s111 = sphi 0, %s95
    $region4: #{tpu_custom_call.1} parent=1 // loop_header_branch
      %16 = sbr.rel (%p14) target = $region8
    $region5: #{tpu_custom_call.1} parent=1 // loop_body
      %s18 = ssub.s32 %s13, 1
      %s19 = ssub.s32 %s13, 2
      %s20 = sadd.s32 %s13, 1
      %s21 = ssub.s32 %s13, %s20
      %p22 = scmp.eq.s32.totalorder %s21, 0
      %s24 = sadd.s32 %s23, 1
      %s25 = scalar_select %p22, %s23, %s24
      %p28 = pneg %p22
      %p29 = scmp.eq.s32.totalorder %s13, 1
      %p30 = por %p28, %p29
      %p31 = scmp.ne.s32.totalorder %s23, %s26
      %p32 = scmp.eq.s32.totalorder %s13, 0
      %p33 = por %p31, %p32
      %p34 = scmp.ne.s32.totalorder %s23, %s26
      %p35 = scmp.eq.s32.totalorder %s18, 1
      %p36 = por %p34, %p35
      %p37 = scmp.ne.s32.totalorder %s26, %s27
      %p38 = scmp.eq.s32.totalorder %s18, 0
      %p39 = por %p37, %p38
      %p40 = scmp.ne.s32.totalorder %s26, %s27
      %p41 = scmp.eq.s32.totalorder %s19, 1
      %p42 = por %p40, %p41
      %p44 = scmp.ne.s32.totalorder %s27, %s43
      %p45 = scmp.eq.s32.totalorder %s19, 0
      %p46 = por %p44, %p45
      %s48 = sadd.s32 %s47, 1
      %p51 = scmp.eq.s32.totalorder %s13, 1
      %p52 = scmp.ne.s32.totalorder %s47, %s49
      %p53 = scmp.eq.s32.totalorder %s13, 0
      %p54 = por %p52, %p53
      %p55 = scmp.ne.s32.totalorder %s47, %s49
      %p56 = scmp.eq.s32.totalorder %s18, 1
      %p57 = por %p55, %p56
      %p58 = scmp.ne.s32.totalorder %s49, %s50
      %p59 = scmp.eq.s32.totalorder %s18, 0
      %p60 = por %p58, %p59
      %p61 = scmp.ne.s32.totalorder %s49, %s50
      %p62 = scmp.eq.s32.totalorder %s19, 1
      %p63 = por %p61, %p62
      %p65 = scmp.ne.s32.totalorder %s50, %s64
      %p66 = scmp.eq.s32.totalorder %s19, 0
      %p67 = por %p65, %p66
      %s69 = sadd.s32 %s68, 1
      %p72 = scmp.eq.s32.totalorder %s13, 1
      %p73 = scmp.ne.s32.totalorder %s68, %s70
      %p74 = scmp.eq.s32.totalorder %s13, 0
      %p75 = por %p73, %p74
      %p76 = scmp.ne.s32.totalorder %s68, %s70
      %p77 = scmp.eq.s32.totalorder %s18, 1
      %p78 = por %p76, %p77
      %p79 = scmp.ne.s32.totalorder %s70, %s71
      %p80 = scmp.eq.s32.totalorder %s18, 0
      %p81 = por %p79, %p80
      %p82 = scmp.ne.s32.totalorder %s70, %s71
      %p83 = scmp.eq.s32.totalorder %s19, 1
      %p84 = por %p82, %p83
      %p86 = scmp.ne.s32.totalorder %s71, %s85
      %p87 = scmp.eq.s32.totalorder %s19, 0
      %p88 = por %p86, %p87
      %s89 = ssub.s32 %s13, %s20
      %p90 = scmp.eq.s32.totalorder %s89, 0
      %s92 = sadd.s32 %s91, 1
      %s93 = scalar_select %p90, %s91, %s92
      %p96 = pneg %p90
      %p97 = scmp.eq.s32.totalorder %s13, 1
      %p98 = por %p96, %p97
      %p99 = scmp.ne.s32.totalorder %s91, %s94
      %p100 = scmp.eq.s32.totalorder %s13, 0
      %p101 = por %p99, %p100
      %p102 = scmp.ne.s32.totalorder %s91, %s94
      %p103 = scmp.eq.s32.totalorder %s18, 1
      %p104 = por %p102, %p103
      %p105 = scmp.ne.s32.totalorder %s94, %s95
      %p106 = scmp.eq.s32.totalorder %s18, 0
      %p107 = por %p105, %p106
      %p108 = scmp.ne.s32.totalorder %s94, %s95
      %p109 = scmp.eq.s32.totalorder %s19, 1
      %p110 = por %p108, %p109
      %p112 = scmp.ne.s32.totalorder %s95, %s111
      %p113 = scmp.eq.s32.totalorder %s19, 0
      %p114 = por %p112, %p113
      %p115 = scmp.le.s32.totalorder 1, %s13
      %p116 = scmp.lt.s32.totalorder %s13, 3
      %p117 = pnand %p115, %p116
      %p118 = pneg %p117
      // Predicated region
      $region9: #{tpu_custom_call.1} parent=5 // pred_check
        _
      $region10: #{tpu_custom_call.1} parent=5 // pred_check_branch
        %120 = sbr.rel (%p117) target = $region12
      $region11: #{tpu_custom_call.1} parent=5 // pred_region
        %s121 = ssub.s32 %s13, 1
        // Predicated region
        $region13: #{tpu_custom_call.1} parent=11 // pred_check
          %p122 = pneg %p60
        $region14: #{tpu_custom_call.1} parent=11 // pred_check_branch
          %124 = sbr.rel (%p122) target = $region16
        $region15: #{tpu_custom_call.1} parent=11 // pred_region
          %s126 = ssub.s32 14464, 14464
          %127 = vsyncadd [#allocation3], %s126
          %s128 = sshll.u32 [#allocation2], 4
          %s129 = int_to_ptr.vmem [resolvable:$true] %s128
          %134 = dma.hbm_to_vmem [thread:$0]  %s1, 14464, %s129, [#allocation3], 128, 128, 8
        $region16: #{tpu_custom_call.1} parent=11 // pred_fallthru
          _
        // Predicated region
        $region17: #{tpu_custom_call.1} parent=11 // pred_check
          %p135 = pneg %p81
        $region18: #{tpu_custom_call.1} parent=11 // pred_check_branch
          %137 = sbr.rel (%p135) target = $region20
        $region19: #{tpu_custom_call.1} parent=11 // pred_region
          _
        $region20: #{tpu_custom_call.1} parent=11 // pred_fallthru
          _
      $region12: #{tpu_custom_call.1} parent=5 // pred_fallthru
        _
      %p138 = scmp.lt.s32.totalorder %s13, 2
      // Predicated region
      $region21: #{tpu_custom_call.1} parent=5 // pred_check
        %p139 = pneg %p138
      $region22: #{tpu_custom_call.1} parent=5 // pred_check_branch
        %141 = sbr.rel (%p139) target = $region24
      $region23: #{tpu_custom_call.1} parent=5 // pred_region
        // Predicated region
        $region25: #{tpu_custom_call.1} parent=23 // pred_check
          %p142 = pneg %p33
        $region26: #{tpu_custom_call.1} parent=23 // pred_check_branch
          %144 = sbr.rel (%p142) target = $region28
        $region27: #{tpu_custom_call.1} parent=23 // pred_region
          %s145 = smul.u32 16, %s13
          %p146 = scmp.lt.s32.totalorder %s145, 31
          %s147 = scalar_select %p146, %s145, 31
          %s148 = smul.addr %s147, 8
          %s149 = scalar_lea.vmem %s0, %s148
          %s150 = smul.u32 16, %s13
        $region28: #{tpu_custom_call.1} parent=23 // pred_fallthru
          _
      $region24: #{tpu_custom_call.1} parent=5 // pred_fallthru
        _
      %p151 = scmp.le.s32.totalorder 1, %s13
      %p152 = scmp.lt.s32.totalorder %s13, 3
      %p153 = pnand %p151, %p152
      %p154 = pneg %p153
      // Predicated region
      $region29: #{tpu_custom_call.1} parent=5 // pred_check
        _
      $region30: #{tpu_custom_call.1} parent=5 // pred_check_branch
        %156 = sbr.rel (%p153) target = $region32
      $region31: #{tpu_custom_call.1} parent=5 // pred_region
        %s157 = ssub.s32 %s13, 1
        // Predicated region
        $region33: #{tpu_custom_call.1} parent=31 // pred_check
          %p158 = pneg %p60
        $region34: #{tpu_custom_call.1} parent=31 // pred_check_branch
          %160 = sbr.rel (%p158) target = $region36
        $region35: #{tpu_custom_call.1} parent=31 // pred_region
          %161 = dma.done [#allocation3], 14464
        $region36: #{tpu_custom_call.1} parent=31 // pred_fallthru
          _
        %s162 = smul.u32 16, %s18
        %p163 = scmp.lt.s32.totalorder %s162, 31
        %s164 = scalar_select %p163, %s162, 31
        %s165 = smul.addr %s164, 8
        %s166 = scalar_lea.vmem %s0, %s165
        %p167 = pneg %p39
        %p168 = pneg %p36
        %p169 = pneg %p60
        %p170 = pneg %p57
        %p171 = pneg %p81
        %p172 = pneg %p78
        %p173 = pneg %p107
        %p174 = pneg %p104
        %s175 = sand.u32 %s94, 1
        %s176 = scalar_lea.sflag [#allocation4], %s175
        %s177 = sand.u32 %s94, 1
        %s178 = smul.addr %s177, 128
        %s179 = scalar_lea.vmem [#allocation5], %s178
        %s180 = smul.u32 16, %s18
        %p181 = scmp.lt.s32.totalorder %s180, 31
        %s182 = scalar_select %p181, %s180, 31
        %s183 = smul.addr %s182, 8
        %s184 = scalar_lea.vmem %s0, %s183
        %s185 = smul.u32 16, %s18
        %s186 = smul.u32 16, %s18
        %v187 = vld [vmem:[%s184] sm:$0xff]
        %v188 = vld [vmem:[%s184 + $0x8] sm:$0xff]
        %v189 = vld [vmem:[%s184 + $0x10] sm:$0xff]
        %v190 = vld [vmem:[%s184 + $0x18] sm:$0xff]
        %v191 = vld [vmem:[%s184 + $0x20] sm:$0xff]
        %v192 = vld [vmem:[%s184 + $0x28] sm:$0xff]
        %v193 = vld [vmem:[%s184 + $0x30] sm:$0xff]
        %v194 = vld [vmem:[%s184 + $0x38] sm:$0xff]
        %v195 = vld [vmem:[%s184 + $0x40] sm:$0xff]
        %v196 = vld [vmem:[%s184 + $0x48] sm:$0xff]
        %v197 = vld [vmem:[%s184 + $0x50] sm:$0xff]
        %v198 = vld [vmem:[%s184 + $0x58] sm:$0xff]
        %v199 = vld [vmem:[%s184 + $0x60] sm:$0xff]
        %v200 = vld [vmem:[%s184 + $0x68] sm:$0xff]
        %v201 = vld [vmem:[%s184 + $0x70] sm:$0xff]
        %v202 = vld [vmem:[%s184 + $0x78] sm:$0xff]
        %v203 = vld [vmem:[#allocation2] sm:$0xff]
        %v204 = vld [vmem:[%s2] sm:$0x1]
        %v205 = vlaneseq
        %v206 = vshrl.u32 %v205, 7
        %v207 = vsub.s32 0, %v206
        %v208 = vrot.slane %v204, %v207
        %vm209 = vcmask 64512
        %v211 = vsel %vm209, %v187, 0
        %v214 = vsel %vm209, %v188, 0
        %v217 = vsel %vm209, %v189, 0
        %v220 = vsel %vm209, %v190, 0
        %v223 = vsel %vm209, %v191, 0
        %v226 = vsel %vm209, %v192, 0
        %v229 = vsel %vm209, %v193, 0
        %v232 = vsel %vm209, %v194, 0
        %v235 = vsel %vm209, %v195, 0
        %v238 = vsel %vm209, %v196, 0
        %v241 = vsel %vm209, %v197, 0
        %v244 = vsel %vm209, %v198, 0
        %v247 = vsel %vm209, %v199, 0
        %v250 = vsel %vm209, %v200, 0
        %v253 = vsel %vm209, %v201, 0
        %v256 = vsel %vm209, %v202, 0
        %258 = vmatprep.subr.mxu0 0.0
        %259 = vmatpush1.msra.mxu0 0.0
        %260 = vmatprep.subr.mxu0 0.0
        %261 = vmatpush1.msra.mxu0 0.0
        %262 = vmatprep.subr.mxu0 0.0
        %263 = vmatpush1.msra.mxu0 0.0
        %264 = vmatprep.subr.mxu0 0.0
        %265 = vmatpush1.msra.mxu0 0.0
        %266 = vmatprep.subr.mxu0 0.0
        %267 = vmatpush1.msra.mxu0 0.0
        %268 = vmatprep.subr.mxu0 0.0
        %269 = vmatpush1.msra.mxu0 0.0
        %270 = vmatprep.subr.mxu0 0.0
        %271 = vmatpush1.msra.mxu0 0.0
        %272 = vmatprep.subr.mxu0 0.0
        %273 = vmatpush1.msra.mxu0 0.0
        %274 = vmatprep.subr.mxu0 0.0
        %275 = vmatpush1.msra.mxu0 0.0
        %276 = vmatprep.subr.mxu0 0.0
        %277 = vmatpush1.msra.mxu0 0.0
        %278 = vmatprep.subr.mxu0 0.0
        %279 = vmatpush1.msra.mxu0 0.0
        %280 = vmatprep.subr.mxu0 0.0
        %281 = vmatpush1.msra.mxu0 0.0
        %282 = vmatprep.subr.mxu0 0.0
        %283 = vmatpush1.msra.mxu0 0.0
        %284 = vmatprep.subr.mxu0 0.0
        %285 = vmatpush1.msra.mxu0 0.0
        %286 = vmatprep.subr.mxu0 0.0
        %287 = vmatpush1.msra.mxu0 0.0
        %288 = vmatprep.subr.mxu0 0.0
        %289 = vmatpush1.msra.mxu0 %v203
        %290 = vmatprep.subr.mxu0 0.0
        %291 = vmatpush2.msra.mxu0 0.0
        %292 = vmatprep.subr.mxu0 0.0
        %293 = vmatpush2.msra.mxu0 0.0
        %294 = vmatprep.subr.mxu0 0.0
        %295 = vmatpush2.msra.mxu0 0.0
        %296 = vmatprep.subr.mxu0 0.0
        %297 = vmatpush2.msra.mxu0 0.0
        %298 = vmatprep.subr.mxu0 0.0
        %299 = vmatpush2.msra.mxu0 0.0
        %300 = vmatprep.subr.mxu0 0.0
        %301 = vmatpush2.msra.mxu0 0.0
        %302 = vmatprep.subr.mxu0 0.0
        %303 = vmatpush2.msra.mxu0 0.0
        %304 = vmatprep.subr.mxu0 0.0
        %305 = vmatpush2.msra.mxu0 0.0
        %306 = vmatprep.subr.mxu0 0.0
        %307 = vmatpush2.msra.mxu0 0.0
        %308 = vmatprep.subr.mxu0 0.0
        %309 = vmatpush2.msra.mxu0 0.0
        %310 = vmatprep.subr.mxu0 0.0
        %311 = vmatpush2.msra.mxu0 0.0
        %312 = vmatprep.subr.mxu0 0.0
        %313 = vmatpush2.msra.mxu0 0.0
        %314 = vmatprep.subr.mxu0 0.0
        %315 = vmatpush2.msra.mxu0 0.0
        %316 = vmatprep.subr.mxu0 0.0
        %317 = vmatpush2.msra.mxu0 0.0
        %318 = vmatprep.subr.mxu0 0.0
        %319 = vmatpush2.msra.mxu0 0.0
        %320 = vmatprep.subr.mxu0 0.0
        %321 = vmatpush2.msra.mxu0 0.0
        %322 = vmatprep.mubr.f32.mxu0 0.0
        %323 = vmatmul.mubr.f32.gmra.mxu0 %v211
        %v324 = vpop.f32.mrf.mxu0
        %v325 = vadd.f32 %v208, %v324
        %v326 = vpop.f32.mrf.mxu0
        %327 = vmatprep.mubr.f32.mxu0 0.0
        %328 = vmatmul.mubr.f32.gmra.mxu0 %v214
        %v329 = vpop.f32.mrf.mxu0
        %v330 = vadd.f32 %v208, %v329
        %v331 = vpop.f32.mrf.mxu0
        %332 = vmatprep.mubr.f32.mxu0 0.0
        %333 = vmatmul.mubr.f32.gmra.mxu0 %v217
        %v334 = vpop.f32.mrf.mxu0
        %v335 = vadd.f32 %v208, %v334
        %v336 = vpop.f32.mrf.mxu0
        %337 = vmatprep.mubr.f32.mxu0 0.0
        %338 = vmatmul.mubr.f32.gmra.mxu0 %v220
        %v339 = vpop.f32.mrf.mxu0
        %v340 = vadd.f32 %v208, %v339
        %v341 = vpop.f32.mrf.mxu0
        %342 = vmatprep.mubr.f32.mxu0 0.0
        %343 = vmatmul.mubr.f32.gmra.mxu0 %v223
        %v344 = vpop.f32.mrf.mxu0
        %v345 = vadd.f32 %v208, %v344
        %v346 = vpop.f32.mrf.mxu0
        %347 = vmatprep.mubr.f32.mxu0 0.0
        %348 = vmatmul.mubr.f32.gmra.mxu0 %v226
        %v349 = vpop.f32.mrf.mxu0
        %v350 = vadd.f32 %v208, %v349
        %v351 = vpop.f32.mrf.mxu0
        %352 = vmatprep.mubr.f32.mxu0 0.0
        %353 = vmatmul.mubr.f32.gmra.mxu0 %v229
        %v354 = vpop.f32.mrf.mxu0
        %v355 = vadd.f32 %v208, %v354
        %v356 = vpop.f32.mrf.mxu0
        %357 = vmatprep.mubr.f32.mxu0 0.0
        %358 = vmatmul.mubr.f32.gmra.mxu0 %v232
        %v359 = vpop.f32.mrf.mxu0
        %v360 = vadd.f32 %v208, %v359
        %v361 = vpop.f32.mrf.mxu0
        %362 = vmatprep.mubr.f32.mxu0 0.0
        %363 = vmatmul.mubr.f32.gmra.mxu0 %v235
        %v364 = vpop.f32.mrf.mxu0
        %v365 = vadd.f32 %v208, %v364
        %v366 = vpop.f32.mrf.mxu0
        %367 = vmatprep.mubr.f32.mxu0 0.0
        %368 = vmatmul.mubr.f32.gmra.mxu0 %v238
        %v369 = vpop.f32.mrf.mxu0
        %v370 = vadd.f32 %v208, %v369
        %v371 = vpop.f32.mrf.mxu0
        %372 = vmatprep.mubr.f32.mxu0 0.0
        %373 = vmatmul.mubr.f32.gmra.mxu0 %v241
        %v374 = vpop.f32.mrf.mxu0
        %v375 = vadd.f32 %v208, %v374
        %v376 = vpop.f32.mrf.mxu0
        %377 = vmatprep.mubr.f32.mxu0 0.0
        %378 = vmatmul.mubr.f32.gmra.mxu0 %v244
        %v379 = vpop.f32.mrf.mxu0
        %v380 = vadd.f32 %v208, %v379
        %v381 = vpop.f32.mrf.mxu0
        %382 = vmatprep.mubr.f32.mxu0 0.0
        %383 = vmatmul.mubr.f32.gmra.mxu0 %v247
        %v384 = vpop.f32.mrf.mxu0
        %v385 = vadd.f32 %v208, %v384
        %v386 = vpop.f32.mrf.mxu0
        %387 = vmatprep.mubr.f32.mxu0 0.0
        %388 = vmatmul.mubr.f32.gmra.mxu0 %v250
        %v389 = vpop.f32.mrf.mxu0
        %v390 = vadd.f32 %v208, %v389
        %v391 = vpop.f32.mrf.mxu0
        %392 = vmatprep.mubr.f32.mxu0 0.0
        %393 = vmatmul.mubr.f32.gmra.mxu0 %v253
        %v394 = vpop.f32.mrf.mxu0
        %v395 = vadd.f32 %v208, %v394
        %v396 = vpop.f32.mrf.mxu0
        %397 = vmatprep.mubr.f32.mxu0 0.0
        %398 = vmatmul.mubr.f32.gmra.mxu0 %v256
        %v399 = vpop.f32.mrf.mxu0
        %v400 = vadd.f32 %v208, %v399
        %v401 = vpop.f32.mrf.mxu0
        %402 = vdwg.mxu0
        %v403 = vld [vmem:[#allocation2 + $0x8] sm:$0xff]
        %v404 = vld [vmem:[#allocation2 + $0x10] sm:$0xff]
        %v405 = vld [vmem:[#allocation2 + $0x18] sm:$0xff]
        %v406 = vld [vmem:[#allocation2 + $0x20] sm:$0xff]
        %v407 = vld [vmem:[#allocation2 + $0x28] sm:$0xff]
        %v408 = vld [vmem:[#allocation2 + $0x30] sm:$0xff]
        %v409 = vld [vmem:[#allocation2 + $0x38] sm:$0xff]
        %v410 = vld [vmem:[#allocation2 + $0x40] sm:$0xff]
        %v411 = vld [vmem:[#allocation2 + $0x48] sm:$0xff]
        %v412 = vld [vmem:[#allocation2 + $0x50] sm:$0xff]
        %v413 = vld [vmem:[#allocation2 + $0x58] sm:$0xff]
        %v414 = vld [vmem:[#allocation2 + $0x60] sm:$0xff]
        %v415 = vld [vmem:[#allocation2 + $0x68] sm:$0xff]
        %v416 = vld [vmem:[#allocation2 + $0x70] sm:$0xff]
        %v417 = vld [vmem:[#allocation2 + $0x78] sm:$0xff]
        %v418 = vld [vmem:[#allocation2 + $0x80] sm:$0xff]
        %v419 = vld [vmem:[%s2 + $0x1] sm:$0x1]
        %v420 = vlaneseq
        %v421 = vshrl.u32 %v420, 7
        %v422 = vsub.s32 0, %v421
        %v423 = vrot.slane %v419, %v422
        %424 = vmatprep.subr.mxu0 0.0
        %425 = vmatpush1.msra.mxu0 %v418
        %426 = vmatprep.subr.mxu0 0.0
        %427 = vmatpush1.msra.mxu0 %v417
        %428 = vmatprep.subr.mxu0 0.0
        %429 = vmatpush1.msra.mxu0 %v416
        %430 = vmatprep.subr.mxu0 0.0
        %431 = vmatpush1.msra.mxu0 %v415
        %432 = vmatprep.subr.mxu0 0.0
        %433 = vmatpush1.msra.mxu0 %v414
        %434 = vmatprep.subr.mxu0 0.0
        %435 = vmatpush1.msra.mxu0 %v413
        %436 = vmatprep.subr.mxu0 0.0
        %437 = vmatpush1.msra.mxu0 %v412
        %438 = vmatprep.subr.mxu0 0.0
        %439 = vmatpush1.msra.mxu0 %v411
        %440 = vmatprep.subr.mxu0 0.0
        %441 = vmatpush1.msra.mxu0 %v410
        %442 = vmatprep.subr.mxu0 0.0
        %443 = vmatpush1.msra.mxu0 %v409
        %444 = vmatprep.subr.mxu0 0.0
        %445 = vmatpush1.msra.mxu0 %v408
        %446 = vmatprep.subr.mxu0 0.0
        %447 = vmatpush1.msra.mxu0 %v407
        %448 = vmatprep.subr.mxu0 0.0
        %449 = vmatpush1.msra.mxu0 %v406
        %450 = vmatprep.subr.mxu0 0.0
        %451 = vmatpush1.msra.mxu0 %v405
        %452 = vmatprep.subr.mxu0 0.0
        %453 = vmatpush1.msra.mxu0 %v404
        %454 = vmatprep.subr.mxu0 0.0
        %455 = vmatpush1.msra.mxu0 %v403
        %456 = vmatprep.subr.mxu0 0.0
        %457 = vmatpush2.msra.mxu0 0.0
        %458 = vmatprep.subr.mxu0 0.0
        %459 = vmatpush2.msra.mxu0 0.0
        %460 = vmatprep.subr.mxu0 0.0
        %461 = vmatpush2.msra.mxu0 0.0
        %462 = vmatprep.subr.mxu0 0.0
        %463 = vmatpush2.msra.mxu0 0.0
        %464 = vmatprep.subr.mxu0 0.0
        %465 = vmatpush2.msra.mxu0 0.0
        %466 = vmatprep.subr.mxu0 0.0
        %467 = vmatpush2.msra.mxu0 0.0
        %468 = vmatprep.subr.mxu0 0.0
        %469 = vmatpush2.msra.mxu0 0.0
        %470 = vmatprep.subr.mxu0 0.0
        %471 = vmatpush2.msra.mxu0 0.0
        %472 = vmatprep.subr.mxu0 0.0
        %473 = vmatpush2.msra.mxu0 0.0
        %474 = vmatprep.subr.mxu0 0.0
        %475 = vmatpush2.msra.mxu0 0.0
        %476 = vmatprep.subr.mxu0 0.0
        %477 = vmatpush2.msra.mxu0 0.0
        %478 = vmatprep.subr.mxu0 0.0
        %479 = vmatpush2.msra.mxu0 0.0
        %480 = vmatprep.subr.mxu0 0.0
        %481 = vmatpush2.msra.mxu0 0.0
        %482 = vmatprep.subr.mxu0 0.0
        %483 = vmatpush2.msra.mxu0 0.0
        %484 = vmatprep.subr.mxu0 0.0
        %485 = vmatpush2.msra.mxu0 0.0
        %486 = vmatprep.subr.mxu0 0.0
        %487 = vmatpush2.msra.mxu0 0.0
        %488 = vmatprep.mubr.f32.mxu0 0.0
        %489 = vmatmul.mubr.f32.gmra.mxu0 %v325
        %v490 = vpop.f32.mrf.mxu0
        %v491 = vadd.f32 %v423, %v490
        %v492 = vpop.f32.mrf.mxu0
        %493 = vmatprep.mubr.f32.mxu0 0.0
        %494 = vmatmul.mubr.f32.gmra.mxu0 %v330
        %v495 = vpop.f32.mrf.mxu0
        %v496 = vadd.f32 %v423, %v495
        %v497 = vpop.f32.mrf.mxu0
        %498 = vmatprep.mubr.f32.mxu0 0.0
        %499 = vmatmul.mubr.f32.gmra.mxu0 %v335
        %v500 = vpop.f32.mrf.mxu0
        %v501 = vadd.f32 %v423, %v500
        %v502 = vpop.f32.mrf.mxu0
        %503 = vmatprep.mubr.f32.mxu0 0.0
        %504 = vmatmul.mubr.f32.gmra.mxu0 %v340
        %v505 = vpop.f32.mrf.mxu0
        %v506 = vadd.f32 %v423, %v505
        %v507 = vpop.f32.mrf.mxu0
        %508 = vmatprep.mubr.f32.mxu0 0.0
        %509 = vmatmul.mubr.f32.gmra.mxu0 %v345
        %v510 = vpop.f32.mrf.mxu0
        %v511 = vadd.f32 %v423, %v510
        %v512 = vpop.f32.mrf.mxu0
        %513 = vmatprep.mubr.f32.mxu0 0.0
        %514 = vmatmul.mubr.f32.gmra.mxu0 %v350
        %v515 = vpop.f32.mrf.mxu0
        %v516 = vadd.f32 %v423, %v515
        %v517 = vpop.f32.mrf.mxu0
        %518 = vmatprep.mubr.f32.mxu0 0.0
        %519 = vmatmul.mubr.f32.gmra.mxu0 %v355
        %v520 = vpop.f32.mrf.mxu0
        %v521 = vadd.f32 %v423, %v520
        %v522 = vpop.f32.mrf.mxu0
        %523 = vmatprep.mubr.f32.mxu0 0.0
        %524 = vmatmul.mubr.f32.gmra.mxu0 %v360
        %v525 = vpop.f32.mrf.mxu0
        %v526 = vadd.f32 %v423, %v525
        %v527 = vpop.f32.mrf.mxu0
        %528 = vmatprep.mubr.f32.mxu0 0.0
        %529 = vmatmul.mubr.f32.gmra.mxu0 %v365
        %v530 = vpop.f32.mrf.mxu0
        %v531 = vadd.f32 %v423, %v530
        %v532 = vpop.f32.mrf.mxu0
        %533 = vmatprep.mubr.f32.mxu0 0.0
        %534 = vmatmul.mubr.f32.gmra.mxu0 %v370
        %v535 = vpop.f32.mrf.mxu0
        %v536 = vadd.f32 %v423, %v535
        %v537 = vpop.f32.mrf.mxu0
        %538 = vmatprep.mubr.f32.mxu0 0.0
        %539 = vmatmul.mubr.f32.gmra.mxu0 %v375
        %v540 = vpop.f32.mrf.mxu0
        %v541 = vadd.f32 %v423, %v540
        %v542 = vpop.f32.mrf.mxu0
        %543 = vmatprep.mubr.f32.mxu0 0.0
        %544 = vmatmul.mubr.f32.gmra.mxu0 %v380
        %v545 = vpop.f32.mrf.mxu0
        %v546 = vadd.f32 %v423, %v545
        %v547 = vpop.f32.mrf.mxu0
        %548 = vmatprep.mubr.f32.mxu0 0.0
        %549 = vmatmul.mubr.f32.gmra.mxu0 %v385
        %v550 = vpop.f32.mrf.mxu0
        %v551 = vadd.f32 %v423, %v550
        %v552 = vpop.f32.mrf.mxu0
        %553 = vmatprep.mubr.f32.mxu0 0.0
        %554 = vmatmul.mubr.f32.gmra.mxu0 %v390
        %v555 = vpop.f32.mrf.mxu0
        %v556 = vadd.f32 %v423, %v555
        %v557 = vpop.f32.mrf.mxu0
        %558 = vmatprep.mubr.f32.mxu0 0.0
        %559 = vmatmul.mubr.f32.gmra.mxu0 %v395
        %v560 = vpop.f32.mrf.mxu0
        %v561 = vadd.f32 %v423, %v560
        %v562 = vpop.f32.mrf.mxu0
        %563 = vmatprep.mubr.f32.mxu0 0.0
        %564 = vmatmul.mubr.f32.gmra.mxu0 %v400
        %v565 = vpop.f32.mrf.mxu0
        %v566 = vadd.f32 %v423, %v565
        %v567 = vpop.f32.mrf.mxu0
        %568 = vdwg.mxu0
        %v569 = vmax.f32 %v491, 0.0
        %v570 = vmax.f32 %v496, 0.0
        %v571 = vmax.f32 %v501, 0.0
        %v572 = vmax.f32 %v506, 0.0
        %v573 = vmax.f32 %v511, 0.0
        %v574 = vmax.f32 %v516, 0.0
        %v575 = vmax.f32 %v521, 0.0
        %v576 = vmax.f32 %v526, 0.0
        %v577 = vmax.f32 %v531, 0.0
        %v578 = vmax.f32 %v536, 0.0
        %v579 = vmax.f32 %v541, 0.0
        %v580 = vmax.f32 %v546, 0.0
        %v581 = vmax.f32 %v551, 0.0
        %v582 = vmax.f32 %v556, 0.0
        %v583 = vmax.f32 %v561, 0.0
        %v584 = vmax.f32 %v566, 0.0
        %v585 = vld [vmem:[#allocation2 + $0x88] sm:$0xff]
        %v586 = vld [vmem:[#allocation2 + $0x90] sm:$0xff]
        %v587 = vld [vmem:[#allocation2 + $0x98] sm:$0xff]
        %v588 = vld [vmem:[#allocation2 + $0xa0] sm:$0xff]
        %v589 = vld [vmem:[#allocation2 + $0xa8] sm:$0xff]
        %v590 = vld [vmem:[#allocation2 + $0xb0] sm:$0xff]
        %v591 = vld [vmem:[#allocation2 + $0xb8] sm:$0xff]
        %v592 = vld [vmem:[#allocation2 + $0xc0] sm:$0xff]
        %v593 = vld [vmem:[#allocation2 + $0xc8] sm:$0xff]
        %v594 = vld [vmem:[#allocation2 + $0xd0] sm:$0xff]
        %v595 = vld [vmem:[#allocation2 + $0xd8] sm:$0xff]
        %v596 = vld [vmem:[#allocation2 + $0xe0] sm:$0xff]
        %v597 = vld [vmem:[#allocation2 + $0xe8] sm:$0xff]
        %v598 = vld [vmem:[#allocation2 + $0xf0] sm:$0xff]
        %v599 = vld [vmem:[#allocation2 + $0xf8] sm:$0xff]
        %v600 = vld [vmem:[#allocation2 + $0x100] sm:$0xff]
        %v601 = vld [vmem:[%s2 + $0x2] sm:$0x1]
        %v602 = vlaneseq
        %v603 = vshrl.u32 %v602, 7
        %v604 = vsub.s32 0, %v603
        %v605 = vrot.slane %v601, %v604
        %606 = vmatprep.subr.mxu0 0.0
        %607 = vmatpush1.msra.mxu0 %v600
        %608 = vmatprep.subr.mxu0 0.0
        %609 = vmatpush1.msra.mxu0 %v599
        %610 = vmatprep.subr.mxu0 0.0
        %611 = vmatpush1.msra.mxu0 %v598
        %612 = vmatprep.subr.mxu0 0.0
        %613 = vmatpush1.msra.mxu0 %v597
        %614 = vmatprep.subr.mxu0 0.0
        %615 = vmatpush1.msra.mxu0 %v596
        %616 = vmatprep.subr.mxu0 0.0
        %617 = vmatpush1.msra.mxu0 %v595
        %618 = vmatprep.subr.mxu0 0.0
        %619 = vmatpush1.msra.mxu0 %v594
        %620 = vmatprep.subr.mxu0 0.0
        %621 = vmatpush1.msra.mxu0 %v593
        %622 = vmatprep.subr.mxu0 0.0
        %623 = vmatpush1.msra.mxu0 %v592
        %624 = vmatprep.subr.mxu0 0.0
        %625 = vmatpush1.msra.mxu0 %v591
        %626 = vmatprep.subr.mxu0 0.0
        %627 = vmatpush1.msra.mxu0 %v590
        %628 = vmatprep.subr.mxu0 0.0
        %629 = vmatpush1.msra.mxu0 %v589
        %630 = vmatprep.subr.mxu0 0.0
        %631 = vmatpush1.msra.mxu0 %v588
        %632 = vmatprep.subr.mxu0 0.0
        %633 = vmatpush1.msra.mxu0 %v587
        %634 = vmatprep.subr.mxu0 0.0
        %635 = vmatpush1.msra.mxu0 %v586
        %636 = vmatprep.subr.mxu0 0.0
        %637 = vmatpush1.msra.mxu0 %v585
        %638 = vmatprep.subr.mxu0 0.0
        %639 = vmatpush2.msra.mxu0 0.0
        %640 = vmatprep.subr.mxu0 0.0
        %641 = vmatpush2.msra.mxu0 0.0
        %642 = vmatprep.subr.mxu0 0.0
        %643 = vmatpush2.msra.mxu0 0.0
        %644 = vmatprep.subr.mxu0 0.0
        %645 = vmatpush2.msra.mxu0 0.0
        %646 = vmatprep.subr.mxu0 0.0
        %647 = vmatpush2.msra.mxu0 0.0
        %648 = vmatprep.subr.mxu0 0.0
        %649 = vmatpush2.msra.mxu0 0.0
        %650 = vmatprep.subr.mxu0 0.0
        %651 = vmatpush2.msra.mxu0 0.0
        %652 = vmatprep.subr.mxu0 0.0
        %653 = vmatpush2.msra.mxu0 0.0
        %654 = vmatprep.subr.mxu0 0.0
        %655 = vmatpush2.msra.mxu0 0.0
        %656 = vmatprep.subr.mxu0 0.0
        %657 = vmatpush2.msra.mxu0 0.0
        %658 = vmatprep.subr.mxu0 0.0
        %659 = vmatpush2.msra.mxu0 0.0
        %660 = vmatprep.subr.mxu0 0.0
        %661 = vmatpush2.msra.mxu0 0.0
        %662 = vmatprep.subr.mxu0 0.0
        %663 = vmatpush2.msra.mxu0 0.0
        %664 = vmatprep.subr.mxu0 0.0
        %665 = vmatpush2.msra.mxu0 0.0
        %666 = vmatprep.subr.mxu0 0.0
        %667 = vmatpush2.msra.mxu0 0.0
        %668 = vmatprep.subr.mxu0 0.0
        %669 = vmatpush2.msra.mxu0 0.0
        %670 = vmatprep.mubr.f32.mxu0 0.0
        %671 = vmatmul.mubr.f32.gmra.mxu0 %v569
        %v672 = vpop.f32.mrf.mxu0
        %v673 = vadd.f32 %v605, %v672
        %v674 = vpop.f32.mrf.mxu0
        %675 = vmatprep.mubr.f32.mxu0 0.0
        %676 = vmatmul.mubr.f32.gmra.mxu0 %v570
        %v677 = vpop.f32.mrf.mxu0
        %v678 = vadd.f32 %v605, %v677
        %v679 = vpop.f32.mrf.mxu0
        %680 = vmatprep.mubr.f32.mxu0 0.0
        %681 = vmatmul.mubr.f32.gmra.mxu0 %v571
        %v682 = vpop.f32.mrf.mxu0
        %v683 = vadd.f32 %v605, %v682
        %v684 = vpop.f32.mrf.mxu0
        %685 = vmatprep.mubr.f32.mxu0 0.0
        %686 = vmatmul.mubr.f32.gmra.mxu0 %v572
        %v687 = vpop.f32.mrf.mxu0
        %v688 = vadd.f32 %v605, %v687
        %v689 = vpop.f32.mrf.mxu0
        %690 = vmatprep.mubr.f32.mxu0 0.0
        %691 = vmatmul.mubr.f32.gmra.mxu0 %v573
        %v692 = vpop.f32.mrf.mxu0
        %v693 = vadd.f32 %v605, %v692
        %v694 = vpop.f32.mrf.mxu0
        %695 = vmatprep.mubr.f32.mxu0 0.0
        %696 = vmatmul.mubr.f32.gmra.mxu0 %v574
        %v697 = vpop.f32.mrf.mxu0
        %v698 = vadd.f32 %v605, %v697
        %v699 = vpop.f32.mrf.mxu0
        %700 = vmatprep.mubr.f32.mxu0 0.0
        %701 = vmatmul.mubr.f32.gmra.mxu0 %v575
        %v702 = vpop.f32.mrf.mxu0
        %v703 = vadd.f32 %v605, %v702
        %v704 = vpop.f32.mrf.mxu0
        %705 = vmatprep.mubr.f32.mxu0 0.0
        %706 = vmatmul.mubr.f32.gmra.mxu0 %v576
        %v707 = vpop.f32.mrf.mxu0
        %v708 = vadd.f32 %v605, %v707
        %v709 = vpop.f32.mrf.mxu0
        %710 = vmatprep.mubr.f32.mxu0 0.0
        %711 = vmatmul.mubr.f32.gmra.mxu0 %v577
        %v712 = vpop.f32.mrf.mxu0
        %v713 = vadd.f32 %v605, %v712
        %v714 = vpop.f32.mrf.mxu0
        %715 = vmatprep.mubr.f32.mxu0 0.0
        %716 = vmatmul.mubr.f32.gmra.mxu0 %v578
        %v717 = vpop.f32.mrf.mxu0
        %v718 = vadd.f32 %v605, %v717
        %v719 = vpop.f32.mrf.mxu0
        %720 = vmatprep.mubr.f32.mxu0 0.0
        %721 = vmatmul.mubr.f32.gmra.mxu0 %v579
        %v722 = vpop.f32.mrf.mxu0
        %v723 = vadd.f32 %v605, %v722
        %v724 = vpop.f32.mrf.mxu0
        %725 = vmatprep.mubr.f32.mxu0 0.0
        %726 = vmatmul.mubr.f32.gmra.mxu0 %v580
        %v727 = vpop.f32.mrf.mxu0
        %v728 = vadd.f32 %v605, %v727
        %v729 = vpop.f32.mrf.mxu0
        %730 = vmatprep.mubr.f32.mxu0 0.0
        %731 = vmatmul.mubr.f32.gmra.mxu0 %v581
        %v732 = vpop.f32.mrf.mxu0
        %v733 = vadd.f32 %v605, %v732
        %v734 = vpop.f32.mrf.mxu0
        %735 = vmatprep.mubr.f32.mxu0 0.0
        %736 = vmatmul.mubr.f32.gmra.mxu0 %v582
        %v737 = vpop.f32.mrf.mxu0
        %v738 = vadd.f32 %v605, %v737
        %v739 = vpop.f32.mrf.mxu0
        %740 = vmatprep.mubr.f32.mxu0 0.0
        %741 = vmatmul.mubr.f32.gmra.mxu0 %v583
        %v742 = vpop.f32.mrf.mxu0
        %v743 = vadd.f32 %v605, %v742
        %v744 = vpop.f32.mrf.mxu0
        %745 = vmatprep.mubr.f32.mxu0 0.0
        %746 = vmatmul.mubr.f32.gmra.mxu0 %v584
        %v747 = vpop.f32.mrf.mxu0
        %v748 = vadd.f32 %v605, %v747
        %v749 = vpop.f32.mrf.mxu0
        %750 = vdwg.mxu0
        %v751 = vadd.f32 %v325, %v673
        %v752 = vadd.f32 %v330, %v678
        %v753 = vadd.f32 %v335, %v683
        %v754 = vadd.f32 %v340, %v688
        %v755 = vadd.f32 %v345, %v693
        %v756 = vadd.f32 %v350, %v698
        %v757 = vadd.f32 %v355, %v703
        %v758 = vadd.f32 %v360, %v708
        %v759 = vadd.f32 %v365, %v713
        %v760 = vadd.f32 %v370, %v718
        %v761 = vadd.f32 %v375, %v723
        %v762 = vadd.f32 %v380, %v728
        %v763 = vadd.f32 %v385, %v733
        %v764 = vadd.f32 %v390, %v738
        %v765 = vadd.f32 %v395, %v743
        %v766 = vadd.f32 %v400, %v748
        %v767 = vld [vmem:[#allocation2 + $0x108] sm:$0xff]
        %v768 = vld [vmem:[#allocation2 + $0x110] sm:$0xff]
        %v769 = vld [vmem:[#allocation2 + $0x118] sm:$0xff]
        %v770 = vld [vmem:[#allocation2 + $0x120] sm:$0xff]
        %v771 = vld [vmem:[#allocation2 + $0x128] sm:$0xff]
        %v772 = vld [vmem:[#allocation2 + $0x130] sm:$0xff]
        %v773 = vld [vmem:[#allocation2 + $0x138] sm:$0xff]
        %v774 = vld [vmem:[#allocation2 + $0x140] sm:$0xff]
        %v775 = vld [vmem:[#allocation2 + $0x148] sm:$0xff]
        %v776 = vld [vmem:[#allocation2 + $0x150] sm:$0xff]
        %v777 = vld [vmem:[#allocation2 + $0x158] sm:$0xff]
        %v778 = vld [vmem:[#allocation2 + $0x160] sm:$0xff]
        %v779 = vld [vmem:[#allocation2 + $0x168] sm:$0xff]
        %v780 = vld [vmem:[#allocation2 + $0x170] sm:$0xff]
        %v781 = vld [vmem:[#allocation2 + $0x178] sm:$0xff]
        %v782 = vld [vmem:[#allocation2 + $0x180] sm:$0xff]
        %v783 = vld [vmem:[%s2 + $0x3] sm:$0x1]
        %v784 = vlaneseq
        %v785 = vshrl.u32 %v784, 7
        %v786 = vsub.s32 0, %v785
        %v787 = vrot.slane %v783, %v786
        %788 = vmatprep.subr.mxu0 0.0
        %789 = vmatpush1.msra.mxu0 %v782
        %790 = vmatprep.subr.mxu0 0.0
        %791 = vmatpush1.msra.mxu0 %v781
        %792 = vmatprep.subr.mxu0 0.0
        %793 = vmatpush1.msra.mxu0 %v780
        %794 = vmatprep.subr.mxu0 0.0
        %795 = vmatpush1.msra.mxu0 %v779
        %796 = vmatprep.subr.mxu0 0.0
        %797 = vmatpush1.msra.mxu0 %v778
        %798 = vmatprep.subr.mxu0 0.0
        %799 = vmatpush1.msra.mxu0 %v777
        %800 = vmatprep.subr.mxu0 0.0
        %801 = vmatpush1.msra.mxu0 %v776
        %802 = vmatprep.subr.mxu0 0.0
        %803 = vmatpush1.msra.mxu0 %v775
        %804 = vmatprep.subr.mxu0 0.0
        %805 = vmatpush1.msra.mxu0 %v774
        %806 = vmatprep.subr.mxu0 0.0
        %807 = vmatpush1.msra.mxu0 %v773
        %808 = vmatprep.subr.mxu0 0.0
        %809 = vmatpush1.msra.mxu0 %v772
        %810 = vmatprep.subr.mxu0 0.0
        %811 = vmatpush1.msra.mxu0 %v771
        %812 = vmatprep.subr.mxu0 0.0
        %813 = vmatpush1.msra.mxu0 %v770
        %814 = vmatprep.subr.mxu0 0.0
        %815 = vmatpush1.msra.mxu0 %v769
        %816 = vmatprep.subr.mxu0 0.0
        %817 = vmatpush1.msra.mxu0 %v768
        %818 = vmatprep.subr.mxu0 0.0
        %819 = vmatpush1.msra.mxu0 %v767
        %820 = vmatprep.subr.mxu0 0.0
        %821 = vmatpush2.msra.mxu0 0.0
        %822 = vmatprep.subr.mxu0 0.0
        %823 = vmatpush2.msra.mxu0 0.0
        %824 = vmatprep.subr.mxu0 0.0
        %825 = vmatpush2.msra.mxu0 0.0
        %826 = vmatprep.subr.mxu0 0.0
        %827 = vmatpush2.msra.mxu0 0.0
        %828 = vmatprep.subr.mxu0 0.0
        %829 = vmatpush2.msra.mxu0 0.0
        %830 = vmatprep.subr.mxu0 0.0
        %831 = vmatpush2.msra.mxu0 0.0
        %832 = vmatprep.subr.mxu0 0.0
        %833 = vmatpush2.msra.mxu0 0.0
        %834 = vmatprep.subr.mxu0 0.0
        %835 = vmatpush2.msra.mxu0 0.0
        %836 = vmatprep.subr.mxu0 0.0
        %837 = vmatpush2.msra.mxu0 0.0
        %838 = vmatprep.subr.mxu0 0.0
        %839 = vmatpush2.msra.mxu0 0.0
        %840 = vmatprep.subr.mxu0 0.0
        %841 = vmatpush2.msra.mxu0 0.0
        %842 = vmatprep.subr.mxu0 0.0
        %843 = vmatpush2.msra.mxu0 0.0
        %844 = vmatprep.subr.mxu0 0.0
        %845 = vmatpush2.msra.mxu0 0.0
        %846 = vmatprep.subr.mxu0 0.0
        %847 = vmatpush2.msra.mxu0 0.0
        %848 = vmatprep.subr.mxu0 0.0
        %849 = vmatpush2.msra.mxu0 0.0
        %850 = vmatprep.subr.mxu0 0.0
        %851 = vmatpush2.msra.mxu0 0.0
        %852 = vmatprep.mubr.f32.mxu0 0.0
        %853 = vmatmul.mubr.f32.gmra.mxu0 %v751
        %v854 = vpop.f32.mrf.mxu0
        %v855 = vadd.f32 %v787, %v854
        %v856 = vpop.f32.mrf.mxu0
        %857 = vmatprep.mubr.f32.mxu0 0.0
        %858 = vmatmul.mubr.f32.gmra.mxu0 %v752
        %v859 = vpop.f32.mrf.mxu0
        %v860 = vadd.f32 %v787, %v859
        %v861 = vpop.f32.mrf.mxu0
        %862 = vmatprep.mubr.f32.mxu0 0.0
        %863 = vmatmul.mubr.f32.gmra.mxu0 %v753
        %v864 = vpop.f32.mrf.mxu0
        %v865 = vadd.f32 %v787, %v864
        %v866 = vpop.f32.mrf.mxu0
        %867 = vmatprep.mubr.f32.mxu0 0.0
        %868 = vmatmul.mubr.f32.gmra.mxu0 %v754
        %v869 = vpop.f32.mrf.mxu0
        %v870 = vadd.f32 %v787, %v869
        %v871 = vpop.f32.mrf.mxu0
        %872 = vmatprep.mubr.f32.mxu0 0.0
        %873 = vmatmul.mubr.f32.gmra.mxu0 %v755
        %v874 = vpop.f32.mrf.mxu0
        %v875 = vadd.f32 %v787, %v874
        %v876 = vpop.f32.mrf.mxu0
        %877 = vmatprep.mubr.f32.mxu0 0.0
        %878 = vmatmul.mubr.f32.gmra.mxu0 %v756
        %v879 = vpop.f32.mrf.mxu0
        %v880 = vadd.f32 %v787, %v879
        %v881 = vpop.f32.mrf.mxu0
        %882 = vmatprep.mubr.f32.mxu0 0.0
        %883 = vmatmul.mubr.f32.gmra.mxu0 %v757
        %v884 = vpop.f32.mrf.mxu0
        %v885 = vadd.f32 %v787, %v884
        %v886 = vpop.f32.mrf.mxu0
        %887 = vmatprep.mubr.f32.mxu0 0.0
        %888 = vmatmul.mubr.f32.gmra.mxu0 %v758
        %v889 = vpop.f32.mrf.mxu0
        %v890 = vadd.f32 %v787, %v889
        %v891 = vpop.f32.mrf.mxu0
        %892 = vmatprep.mubr.f32.mxu0 0.0
        %893 = vmatmul.mubr.f32.gmra.mxu0 %v759
        %v894 = vpop.f32.mrf.mxu0
        %v895 = vadd.f32 %v787, %v894
        %v896 = vpop.f32.mrf.mxu0
        %897 = vmatprep.mubr.f32.mxu0 0.0
        %898 = vmatmul.mubr.f32.gmra.mxu0 %v760
        %v899 = vpop.f32.mrf.mxu0
        %v900 = vadd.f32 %v787, %v899
        %v901 = vpop.f32.mrf.mxu0
        %902 = vmatprep.mubr.f32.mxu0 0.0
        %903 = vmatmul.mubr.f32.gmra.mxu0 %v761
        %v904 = vpop.f32.mrf.mxu0
        %v905 = vadd.f32 %v787, %v904
        %v906 = vpop.f32.mrf.mxu0
        %907 = vmatprep.mubr.f32.mxu0 0.0
        %908 = vmatmul.mubr.f32.gmra.mxu0 %v762
        %v909 = vpop.f32.mrf.mxu0
        %v910 = vadd.f32 %v787, %v909
        %v911 = vpop.f32.mrf.mxu0
        %912 = vmatprep.mubr.f32.mxu0 0.0
        %913 = vmatmul.mubr.f32.gmra.mxu0 %v763
        %v914 = vpop.f32.mrf.mxu0
        %v915 = vadd.f32 %v787, %v914
        %v916 = vpop.f32.mrf.mxu0
        %917 = vmatprep.mubr.f32.mxu0 0.0
        %918 = vmatmul.mubr.f32.gmra.mxu0 %v764
        %v919 = vpop.f32.mrf.mxu0
        %v920 = vadd.f32 %v787, %v919
        %v921 = vpop.f32.mrf.mxu0
        %922 = vmatprep.mubr.f32.mxu0 0.0
        %923 = vmatmul.mubr.f32.gmra.mxu0 %v765
        %v924 = vpop.f32.mrf.mxu0
        %v925 = vadd.f32 %v787, %v924
        %v926 = vpop.f32.mrf.mxu0
        %927 = vmatprep.mubr.f32.mxu0 0.0
        %928 = vmatmul.mubr.f32.gmra.mxu0 %v766
        %v929 = vpop.f32.mrf.mxu0
        %v930 = vadd.f32 %v787, %v929
        %v931 = vpop.f32.mrf.mxu0
        %932 = vdwg.mxu0
        %v933 = vmax.f32 %v855, 0.0
        %v934 = vmax.f32 %v860, 0.0
        %v935 = vmax.f32 %v865, 0.0
        %v936 = vmax.f32 %v870, 0.0
        %v937 = vmax.f32 %v875, 0.0
        %v938 = vmax.f32 %v880, 0.0
        %v939 = vmax.f32 %v885, 0.0
        %v940 = vmax.f32 %v890, 0.0
        %v941 = vmax.f32 %v895, 0.0
        %v942 = vmax.f32 %v900, 0.0
        %v943 = vmax.f32 %v905, 0.0
        %v944 = vmax.f32 %v910, 0.0
        %v945 = vmax.f32 %v915, 0.0
        %v946 = vmax.f32 %v920, 0.0
        %v947 = vmax.f32 %v925, 0.0
        %v948 = vmax.f32 %v930, 0.0
        %v949 = vld [vmem:[#allocation2 + $0x188] sm:$0xff]
        %v950 = vld [vmem:[#allocation2 + $0x190] sm:$0xff]
        %v951 = vld [vmem:[#allocation2 + $0x198] sm:$0xff]
        %v952 = vld [vmem:[#allocation2 + $0x1a0] sm:$0xff]
        %v953 = vld [vmem:[#allocation2 + $0x1a8] sm:$0xff]
        %v954 = vld [vmem:[#allocation2 + $0x1b0] sm:$0xff]
        %v955 = vld [vmem:[#allocation2 + $0x1b8] sm:$0xff]
        %v956 = vld [vmem:[#allocation2 + $0x1c0] sm:$0xff]
        %v957 = vld [vmem:[#allocation2 + $0x1c8] sm:$0xff]
        %v958 = vld [vmem:[#allocation2 + $0x1d0] sm:$0xff]
        %v959 = vld [vmem:[#allocation2 + $0x1d8] sm:$0xff]
        %v960 = vld [vmem:[#allocation2 + $0x1e0] sm:$0xff]
        %v961 = vld [vmem:[#allocation2 + $0x1e8] sm:$0xff]
        %v962 = vld [vmem:[#allocation2 + $0x1f0] sm:$0xff]
        %v963 = vld [vmem:[#allocation2 + $0x1f8] sm:$0xff]
        %v964 = vld [vmem:[#allocation2 + $0x200] sm:$0xff]
        %v965 = vld [vmem:[%s2 + $0x4] sm:$0x1]
        %v966 = vlaneseq
        %v967 = vshrl.u32 %v966, 7
        %v968 = vsub.s32 0, %v967
        %v969 = vrot.slane %v965, %v968
        %970 = vmatprep.subr.mxu0 0.0
        %971 = vmatpush1.msra.mxu0 %v964
        %972 = vmatprep.subr.mxu0 0.0
        %973 = vmatpush1.msra.mxu0 %v963
        %974 = vmatprep.subr.mxu0 0.0
        %975 = vmatpush1.msra.mxu0 %v962
        %976 = vmatprep.subr.mxu0 0.0
        %977 = vmatpush1.msra.mxu0 %v961
        %978 = vmatprep.subr.mxu0 0.0
        %979 = vmatpush1.msra.mxu0 %v960
        %980 = vmatprep.subr.mxu0 0.0
        %981 = vmatpush1.msra.mxu0 %v959
        %982 = vmatprep.subr.mxu0 0.0
        %983 = vmatpush1.msra.mxu0 %v958
        %984 = vmatprep.subr.mxu0 0.0
        %985 = vmatpush1.msra.mxu0 %v957
        %986 = vmatprep.subr.mxu0 0.0
        %987 = vmatpush1.msra.mxu0 %v956
        %988 = vmatprep.subr.mxu0 0.0
        %989 = vmatpush1.msra.mxu0 %v955
        %990 = vmatprep.subr.mxu0 0.0
        %991 = vmatpush1.msra.mxu0 %v954
        %992 = vmatprep.subr.mxu0 0.0
        %993 = vmatpush1.msra.mxu0 %v953
        %994 = vmatprep.subr.mxu0 0.0
        %995 = vmatpush1.msra.mxu0 %v952
        %996 = vmatprep.subr.mxu0 0.0
        %997 = vmatpush1.msra.mxu0 %v951
        %998 = vmatprep.subr.mxu0 0.0
        %999 = vmatpush1.msra.mxu0 %v950
        %1000 = vmatprep.subr.mxu0 0.0
        %1001 = vmatpush1.msra.mxu0 %v949
        %1002 = vmatprep.subr.mxu0 0.0
        %1003 = vmatpush2.msra.mxu0 0.0
        %1004 = vmatprep.subr.mxu0 0.0
        %1005 = vmatpush2.msra.mxu0 0.0
        %1006 = vmatprep.subr.mxu0 0.0
        %1007 = vmatpush2.msra.mxu0 0.0
        %1008 = vmatprep.subr.mxu0 0.0
        %1009 = vmatpush2.msra.mxu0 0.0
        %1010 = vmatprep.subr.mxu0 0.0
        %1011 = vmatpush2.msra.mxu0 0.0
        %1012 = vmatprep.subr.mxu0 0.0
        %1013 = vmatpush2.msra.mxu0 0.0
        %1014 = vmatprep.subr.mxu0 0.0
        %1015 = vmatpush2.msra.mxu0 0.0
        %1016 = vmatprep.subr.mxu0 0.0
        %1017 = vmatpush2.msra.mxu0 0.0
        %1018 = vmatprep.subr.mxu0 0.0
        %1019 = vmatpush2.msra.mxu0 0.0
        %1020 = vmatprep.subr.mxu0 0.0
        %1021 = vmatpush2.msra.mxu0 0.0
        %1022 = vmatprep.subr.mxu0 0.0
        %1023 = vmatpush2.msra.mxu0 0.0
        %1024 = vmatprep.subr.mxu0 0.0
        %1025 = vmatpush2.msra.mxu0 0.0
        %1026 = vmatprep.subr.mxu0 0.0
        %1027 = vmatpush2.msra.mxu0 0.0
        %1028 = vmatprep.subr.mxu0 0.0
        %1029 = vmatpush2.msra.mxu0 0.0
        %1030 = vmatprep.subr.mxu0 0.0
        %1031 = vmatpush2.msra.mxu0 0.0
        %1032 = vmatprep.subr.mxu0 0.0
        %1033 = vmatpush2.msra.mxu0 0.0
        %1034 = vmatprep.mubr.f32.mxu0 0.0
        %1035 = vmatmul.mubr.f32.gmra.mxu0 %v933
        %v1036 = vpop.f32.mrf.mxu0
        %v1037 = vadd.f32 %v969, %v1036
        %v1038 = vpop.f32.mrf.mxu0
        %1039 = vmatprep.mubr.f32.mxu0 0.0
        %1040 = vmatmul.mubr.f32.gmra.mxu0 %v934
        %v1041 = vpop.f32.mrf.mxu0
        %v1042 = vadd.f32 %v969, %v1041
        %v1043 = vpop.f32.mrf.mxu0
        %1044 = vmatprep.mubr.f32.mxu0 0.0
        %1045 = vmatmul.mubr.f32.gmra.mxu0 %v935
        %v1046 = vpop.f32.mrf.mxu0
        %v1047 = vadd.f32 %v969, %v1046
        %v1048 = vpop.f32.mrf.mxu0
        %1049 = vmatprep.mubr.f32.mxu0 0.0
        %1050 = vmatmul.mubr.f32.gmra.mxu0 %v936
        %v1051 = vpop.f32.mrf.mxu0
        %v1052 = vadd.f32 %v969, %v1051
        %v1053 = vpop.f32.mrf.mxu0
        %1054 = vmatprep.mubr.f32.mxu0 0.0
        %1055 = vmatmul.mubr.f32.gmra.mxu0 %v937
        %v1056 = vpop.f32.mrf.mxu0
        %v1057 = vadd.f32 %v969, %v1056
        %v1058 = vpop.f32.mrf.mxu0
        %1059 = vmatprep.mubr.f32.mxu0 0.0
        %1060 = vmatmul.mubr.f32.gmra.mxu0 %v938
        %v1061 = vpop.f32.mrf.mxu0
        %v1062 = vadd.f32 %v969, %v1061
        %v1063 = vpop.f32.mrf.mxu0
        %1064 = vmatprep.mubr.f32.mxu0 0.0
        %1065 = vmatmul.mubr.f32.gmra.mxu0 %v939
        %v1066 = vpop.f32.mrf.mxu0
        %v1067 = vadd.f32 %v969, %v1066
        %v1068 = vpop.f32.mrf.mxu0
        %1069 = vmatprep.mubr.f32.mxu0 0.0
        %1070 = vmatmul.mubr.f32.gmra.mxu0 %v940
        %v1071 = vpop.f32.mrf.mxu0
        %v1072 = vadd.f32 %v969, %v1071
        %v1073 = vpop.f32.mrf.mxu0
        %1074 = vmatprep.mubr.f32.mxu0 0.0
        %1075 = vmatmul.mubr.f32.gmra.mxu0 %v941
        %v1076 = vpop.f32.mrf.mxu0
        %v1077 = vadd.f32 %v969, %v1076
        %v1078 = vpop.f32.mrf.mxu0
        %1079 = vmatprep.mubr.f32.mxu0 0.0
        %1080 = vmatmul.mubr.f32.gmra.mxu0 %v942
        %v1081 = vpop.f32.mrf.mxu0
        %v1082 = vadd.f32 %v969, %v1081
        %v1083 = vpop.f32.mrf.mxu0
        %1084 = vmatprep.mubr.f32.mxu0 0.0
        %1085 = vmatmul.mubr.f32.gmra.mxu0 %v943
        %v1086 = vpop.f32.mrf.mxu0
        %v1087 = vadd.f32 %v969, %v1086
        %v1088 = vpop.f32.mrf.mxu0
        %1089 = vmatprep.mubr.f32.mxu0 0.0
        %1090 = vmatmul.mubr.f32.gmra.mxu0 %v944
        %v1091 = vpop.f32.mrf.mxu0
        %v1092 = vadd.f32 %v969, %v1091
        %v1093 = vpop.f32.mrf.mxu0
        %1094 = vmatprep.mubr.f32.mxu0 0.0
        %1095 = vmatmul.mubr.f32.gmra.mxu0 %v945
        %v1096 = vpop.f32.mrf.mxu0
        %v1097 = vadd.f32 %v969, %v1096
        %v1098 = vpop.f32.mrf.mxu0
        %1099 = vmatprep.mubr.f32.mxu0 0.0
        %1100 = vmatmul.mubr.f32.gmra.mxu0 %v946
        %v1101 = vpop.f32.mrf.mxu0
        %v1102 = vadd.f32 %v969, %v1101
        %v1103 = vpop.f32.mrf.mxu0
        %1104 = vmatprep.mubr.f32.mxu0 0.0
        %1105 = vmatmul.mubr.f32.gmra.mxu0 %v947
        %v1106 = vpop.f32.mrf.mxu0
        %v1107 = vadd.f32 %v969, %v1106
        %v1108 = vpop.f32.mrf.mxu0
        %1109 = vmatprep.mubr.f32.mxu0 0.0
        %1110 = vmatmul.mubr.f32.gmra.mxu0 %v948
        %v1111 = vpop.f32.mrf.mxu0
        %v1112 = vadd.f32 %v969, %v1111
        %v1113 = vpop.f32.mrf.mxu0
        %1114 = vdwg.mxu0
        %v1115 = vld [vmem:[#allocation2 + $0x208] sm:$0xff]
        %v1116 = vld [vmem:[#allocation2 + $0x210] sm:$0xff]
        %v1117 = vld [vmem:[#allocation2 + $0x218] sm:$0xff]
        %v1118 = vld [vmem:[#allocation2 + $0x220] sm:$0xff]
        %v1119 = vld [vmem:[#allocation2 + $0x228] sm:$0xff]
        %v1120 = vld [vmem:[#allocation2 + $0x230] sm:$0xff]
        %v1121 = vld [vmem:[#allocation2 + $0x238] sm:$0xff]
        %v1122 = vld [vmem:[#allocation2 + $0x240] sm:$0xff]
        %v1123 = vld [vmem:[#allocation2 + $0x248] sm:$0xff]
        %v1124 = vld [vmem:[#allocation2 + $0x250] sm:$0xff]
        %v1125 = vld [vmem:[#allocation2 + $0x258] sm:$0xff]
        %v1126 = vld [vmem:[#allocation2 + $0x260] sm:$0xff]
        %v1127 = vld [vmem:[#allocation2 + $0x268] sm:$0xff]
        %v1128 = vld [vmem:[#allocation2 + $0x270] sm:$0xff]
        %v1129 = vld [vmem:[#allocation2 + $0x278] sm:$0xff]
        %v1130 = vld [vmem:[#allocation2 + $0x280] sm:$0xff]
        %v1131 = vld [vmem:[%s2 + $0x5] sm:$0x1]
        %v1132 = vlaneseq
        %v1133 = vshrl.u32 %v1132, 7
        %v1134 = vsub.s32 0, %v1133
        %v1135 = vrot.slane %v1131, %v1134
        %1136 = vmatprep.subr.mxu0 0.0
        %1137 = vmatpush1.msra.mxu0 %v1130
        %1138 = vmatprep.subr.mxu0 0.0
        %1139 = vmatpush1.msra.mxu0 %v1129
        %1140 = vmatprep.subr.mxu0 0.0
        %1141 = vmatpush1.msra.mxu0 %v1128
        %1142 = vmatprep.subr.mxu0 0.0
        %1143 = vmatpush1.msra.mxu0 %v1127
        %1144 = vmatprep.subr.mxu0 0.0
        %1145 = vmatpush1.msra.mxu0 %v1126
        %1146 = vmatprep.subr.mxu0 0.0
        %1147 = vmatpush1.msra.mxu0 %v1125
        %1148 = vmatprep.subr.mxu0 0.0
        %1149 = vmatpush1.msra.mxu0 %v1124
        %1150 = vmatprep.subr.mxu0 0.0
        %1151 = vmatpush1.msra.mxu0 %v1123
        %1152 = vmatprep.subr.mxu0 0.0
        %1153 = vmatpush1.msra.mxu0 %v1122
        %1154 = vmatprep.subr.mxu0 0.0
        %1155 = vmatpush1.msra.mxu0 %v1121
        %1156 = vmatprep.subr.mxu0 0.0
        %1157 = vmatpush1.msra.mxu0 %v1120
        %1158 = vmatprep.subr.mxu0 0.0
        %1159 = vmatpush1.msra.mxu0 %v1119
        %1160 = vmatprep.subr.mxu0 0.0
        %1161 = vmatpush1.msra.mxu0 %v1118
        %1162 = vmatprep.subr.mxu0 0.0
        %1163 = vmatpush1.msra.mxu0 %v1117
        %1164 = vmatprep.subr.mxu0 0.0
        %1165 = vmatpush1.msra.mxu0 %v1116
        %1166 = vmatprep.subr.mxu0 0.0
        %1167 = vmatpush1.msra.mxu0 %v1115
        %1168 = vmatprep.subr.mxu0 0.0
        %1169 = vmatpush2.msra.mxu0 0.0
        %1170 = vmatprep.subr.mxu0 0.0
        %1171 = vmatpush2.msra.mxu0 0.0
        %1172 = vmatprep.subr.mxu0 0.0
        %1173 = vmatpush2.msra.mxu0 0.0
        %1174 = vmatprep.subr.mxu0 0.0
        %1175 = vmatpush2.msra.mxu0 0.0
        %1176 = vmatprep.subr.mxu0 0.0
        %1177 = vmatpush2.msra.mxu0 0.0
        %1178 = vmatprep.subr.mxu0 0.0
        %1179 = vmatpush2.msra.mxu0 0.0
        %1180 = vmatprep.subr.mxu0 0.0
        %1181 = vmatpush2.msra.mxu0 0.0
        %1182 = vmatprep.subr.mxu0 0.0
        %1183 = vmatpush2.msra.mxu0 0.0
        %1184 = vmatprep.subr.mxu0 0.0
        %1185 = vmatpush2.msra.mxu0 0.0
        %1186 = vmatprep.subr.mxu0 0.0
        %1187 = vmatpush2.msra.mxu0 0.0
        %1188 = vmatprep.subr.mxu0 0.0
        %1189 = vmatpush2.msra.mxu0 0.0
        %1190 = vmatprep.subr.mxu0 0.0
        %1191 = vmatpush2.msra.mxu0 0.0
        %1192 = vmatprep.subr.mxu0 0.0
        %1193 = vmatpush2.msra.mxu0 0.0
        %1194 = vmatprep.subr.mxu0 0.0
        %1195 = vmatpush2.msra.mxu0 0.0
        %1196 = vmatprep.subr.mxu0 0.0
        %1197 = vmatpush2.msra.mxu0 0.0
        %1198 = vmatprep.subr.mxu0 0.0
        %1199 = vmatpush2.msra.mxu0 0.0
        %1200 = vmatprep.mubr.f32.mxu0 0.0
        %1201 = vmatmul.mubr.f32.gmra.mxu0 %v1037
        %v1202 = vpop.f32.mrf.mxu0
        %v1203 = vadd.f32 %v1135, %v1202
        %v1204 = vpop.f32.mrf.mxu0
        %1205 = vmatprep.mubr.f32.mxu0 0.0
        %1206 = vmatmul.mubr.f32.gmra.mxu0 %v1042
        %v1207 = vpop.f32.mrf.mxu0
        %v1208 = vadd.f32 %v1135, %v1207
        %v1209 = vpop.f32.mrf.mxu0
        %1210 = vmatprep.mubr.f32.mxu0 0.0
        %1211 = vmatmul.mubr.f32.gmra.mxu0 %v1047
        %v1212 = vpop.f32.mrf.mxu0
        %v1213 = vadd.f32 %v1135, %v1212
        %v1214 = vpop.f32.mrf.mxu0
        %1215 = vmatprep.mubr.f32.mxu0 0.0
        %1216 = vmatmul.mubr.f32.gmra.mxu0 %v1052
        %v1217 = vpop.f32.mrf.mxu0
        %v1218 = vadd.f32 %v1135, %v1217
        %v1219 = vpop.f32.mrf.mxu0
        %1220 = vmatprep.mubr.f32.mxu0 0.0
        %1221 = vmatmul.mubr.f32.gmra.mxu0 %v1057
        %v1222 = vpop.f32.mrf.mxu0
        %v1223 = vadd.f32 %v1135, %v1222
        %v1224 = vpop.f32.mrf.mxu0
        %1225 = vmatprep.mubr.f32.mxu0 0.0
        %1226 = vmatmul.mubr.f32.gmra.mxu0 %v1062
        %v1227 = vpop.f32.mrf.mxu0
        %v1228 = vadd.f32 %v1135, %v1227
        %v1229 = vpop.f32.mrf.mxu0
        %1230 = vmatprep.mubr.f32.mxu0 0.0
        %1231 = vmatmul.mubr.f32.gmra.mxu0 %v1067
        %v1232 = vpop.f32.mrf.mxu0
        %v1233 = vadd.f32 %v1135, %v1232
        %v1234 = vpop.f32.mrf.mxu0
        %1235 = vmatprep.mubr.f32.mxu0 0.0
        %1236 = vmatmul.mubr.f32.gmra.mxu0 %v1072
        %v1237 = vpop.f32.mrf.mxu0
        %v1238 = vadd.f32 %v1135, %v1237
        %v1239 = vpop.f32.mrf.mxu0
        %1240 = vmatprep.mubr.f32.mxu0 0.0
        %1241 = vmatmul.mubr.f32.gmra.mxu0 %v1077
        %v1242 = vpop.f32.mrf.mxu0
        %v1243 = vadd.f32 %v1135, %v1242
        %v1244 = vpop.f32.mrf.mxu0
        %1245 = vmatprep.mubr.f32.mxu0 0.0
        %1246 = vmatmul.mubr.f32.gmra.mxu0 %v1082
        %v1247 = vpop.f32.mrf.mxu0
        %v1248 = vadd.f32 %v1135, %v1247
        %v1249 = vpop.f32.mrf.mxu0
        %1250 = vmatprep.mubr.f32.mxu0 0.0
        %1251 = vmatmul.mubr.f32.gmra.mxu0 %v1087
        %v1252 = vpop.f32.mrf.mxu0
        %v1253 = vadd.f32 %v1135, %v1252
        %v1254 = vpop.f32.mrf.mxu0
        %1255 = vmatprep.mubr.f32.mxu0 0.0
        %1256 = vmatmul.mubr.f32.gmra.mxu0 %v1092
        %v1257 = vpop.f32.mrf.mxu0
        %v1258 = vadd.f32 %v1135, %v1257
        %v1259 = vpop.f32.mrf.mxu0
        %1260 = vmatprep.mubr.f32.mxu0 0.0
        %1261 = vmatmul.mubr.f32.gmra.mxu0 %v1097
        %v1262 = vpop.f32.mrf.mxu0
        %v1263 = vadd.f32 %v1135, %v1262
        %v1264 = vpop.f32.mrf.mxu0
        %1265 = vmatprep.mubr.f32.mxu0 0.0
        %1266 = vmatmul.mubr.f32.gmra.mxu0 %v1102
        %v1267 = vpop.f32.mrf.mxu0
        %v1268 = vadd.f32 %v1135, %v1267
        %v1269 = vpop.f32.mrf.mxu0
        %1270 = vmatprep.mubr.f32.mxu0 0.0
        %1271 = vmatmul.mubr.f32.gmra.mxu0 %v1107
        %v1272 = vpop.f32.mrf.mxu0
        %v1273 = vadd.f32 %v1135, %v1272
        %v1274 = vpop.f32.mrf.mxu0
        %1275 = vmatprep.mubr.f32.mxu0 0.0
        %1276 = vmatmul.mubr.f32.gmra.mxu0 %v1112
        %v1277 = vpop.f32.mrf.mxu0
        %v1278 = vadd.f32 %v1135, %v1277
        %v1279 = vpop.f32.mrf.mxu0
        %1280 = vdwg.mxu0
        %v1281 = vmax.f32 %v1203, 0.0
        %v1282 = vmax.f32 %v1208, 0.0
        %v1283 = vmax.f32 %v1213, 0.0
        %v1284 = vmax.f32 %v1218, 0.0
        %v1285 = vmax.f32 %v1223, 0.0
        %v1286 = vmax.f32 %v1228, 0.0
        %v1287 = vmax.f32 %v1233, 0.0
        %v1288 = vmax.f32 %v1238, 0.0
        %v1289 = vmax.f32 %v1243, 0.0
        %v1290 = vmax.f32 %v1248, 0.0
        %v1291 = vmax.f32 %v1253, 0.0
        %v1292 = vmax.f32 %v1258, 0.0
        %v1293 = vmax.f32 %v1263, 0.0
        %v1294 = vmax.f32 %v1268, 0.0
        %v1295 = vmax.f32 %v1273, 0.0
        %v1296 = vmax.f32 %v1278, 0.0
        %v1297 = vld [vmem:[#allocation2 + $0x288] sm:$0xff]
        %v1298 = vld [vmem:[#allocation2 + $0x290] sm:$0xff]
        %v1299 = vld [vmem:[#allocation2 + $0x298] sm:$0xff]
        %v1300 = vld [vmem:[#allocation2 + $0x2a0] sm:$0xff]
        %v1301 = vld [vmem:[#allocation2 + $0x2a8] sm:$0xff]
        %v1302 = vld [vmem:[#allocation2 + $0x2b0] sm:$0xff]
        %v1303 = vld [vmem:[#allocation2 + $0x2b8] sm:$0xff]
        %v1304 = vld [vmem:[#allocation2 + $0x2c0] sm:$0xff]
        %v1305 = vld [vmem:[#allocation2 + $0x2c8] sm:$0xff]
        %v1306 = vld [vmem:[#allocation2 + $0x2d0] sm:$0xff]
        %v1307 = vld [vmem:[#allocation2 + $0x2d8] sm:$0xff]
        %v1308 = vld [vmem:[#allocation2 + $0x2e0] sm:$0xff]
        %v1309 = vld [vmem:[#allocation2 + $0x2e8] sm:$0xff]
        %v1310 = vld [vmem:[#allocation2 + $0x2f0] sm:$0xff]
        %v1311 = vld [vmem:[#allocation2 + $0x2f8] sm:$0xff]
        %v1312 = vld [vmem:[#allocation2 + $0x300] sm:$0xff]
        %v1313 = vld [vmem:[%s2 + $0x6] sm:$0x1]
        %v1314 = vlaneseq
        %v1315 = vshrl.u32 %v1314, 7
        %v1316 = vsub.s32 0, %v1315
        %v1317 = vrot.slane %v1313, %v1316
        %1318 = vmatprep.subr.mxu0 0.0
        %1319 = vmatpush1.msra.mxu0 %v1312
        %1320 = vmatprep.subr.mxu0 0.0
        %1321 = vmatpush1.msra.mxu0 %v1311
        %1322 = vmatprep.subr.mxu0 0.0
        %1323 = vmatpush1.msra.mxu0 %v1310
        %1324 = vmatprep.subr.mxu0 0.0
        %1325 = vmatpush1.msra.mxu0 %v1309
        %1326 = vmatprep.subr.mxu0 0.0
        %1327 = vmatpush1.msra.mxu0 %v1308
        %1328 = vmatprep.subr.mxu0 0.0
        %1329 = vmatpush1.msra.mxu0 %v1307
        %1330 = vmatprep.subr.mxu0 0.0
        %1331 = vmatpush1.msra.mxu0 %v1306
        %1332 = vmatprep.subr.mxu0 0.0
        %1333 = vmatpush1.msra.mxu0 %v1305
        %1334 = vmatprep.subr.mxu0 0.0
        %1335 = vmatpush1.msra.mxu0 %v1304
        %1336 = vmatprep.subr.mxu0 0.0
        %1337 = vmatpush1.msra.mxu0 %v1303
        %1338 = vmatprep.subr.mxu0 0.0
        %1339 = vmatpush1.msra.mxu0 %v1302
        %1340 = vmatprep.subr.mxu0 0.0
        %1341 = vmatpush1.msra.mxu0 %v1301
        %1342 = vmatprep.subr.mxu0 0.0
        %1343 = vmatpush1.msra.mxu0 %v1300
        %1344 = vmatprep.subr.mxu0 0.0
        %1345 = vmatpush1.msra.mxu0 %v1299
        %1346 = vmatprep.subr.mxu0 0.0
        %1347 = vmatpush1.msra.mxu0 %v1298
        %1348 = vmatprep.subr.mxu0 0.0
        %1349 = vmatpush1.msra.mxu0 %v1297
        %1350 = vmatprep.subr.mxu0 0.0
        %1351 = vmatpush2.msra.mxu0 0.0
        %1352 = vmatprep.subr.mxu0 0.0
        %1353 = vmatpush2.msra.mxu0 0.0
        %1354 = vmatprep.subr.mxu0 0.0
        %1355 = vmatpush2.msra.mxu0 0.0
        %1356 = vmatprep.subr.mxu0 0.0
        %1357 = vmatpush2.msra.mxu0 0.0
        %1358 = vmatprep.subr.mxu0 0.0
        %1359 = vmatpush2.msra.mxu0 0.0
        %1360 = vmatprep.subr.mxu0 0.0
        %1361 = vmatpush2.msra.mxu0 0.0
        %1362 = vmatprep.subr.mxu0 0.0
        %1363 = vmatpush2.msra.mxu0 0.0
        %1364 = vmatprep.subr.mxu0 0.0
        %1365 = vmatpush2.msra.mxu0 0.0
        %1366 = vmatprep.subr.mxu0 0.0
        %1367 = vmatpush2.msra.mxu0 0.0
        %1368 = vmatprep.subr.mxu0 0.0
        %1369 = vmatpush2.msra.mxu0 0.0
        %1370 = vmatprep.subr.mxu0 0.0
        %1371 = vmatpush2.msra.mxu0 0.0
        %1372 = vmatprep.subr.mxu0 0.0
        %1373 = vmatpush2.msra.mxu0 0.0
        %1374 = vmatprep.subr.mxu0 0.0
        %1375 = vmatpush2.msra.mxu0 0.0
        %1376 = vmatprep.subr.mxu0 0.0
        %1377 = vmatpush2.msra.mxu0 0.0
        %1378 = vmatprep.subr.mxu0 0.0
        %1379 = vmatpush2.msra.mxu0 0.0
        %1380 = vmatprep.subr.mxu0 0.0
        %1381 = vmatpush2.msra.mxu0 0.0
        %1382 = vmatprep.mubr.f32.mxu0 0.0
        %1383 = vmatmul.mubr.f32.gmra.mxu0 %v1281
        %v1384 = vpop.f32.mrf.mxu0
        %v1385 = vadd.f32 %v1317, %v1384
        %v1386 = vpop.f32.mrf.mxu0
        %1387 = vmatprep.mubr.f32.mxu0 0.0
        %1388 = vmatmul.mubr.f32.gmra.mxu0 %v1282
        %v1389 = vpop.f32.mrf.mxu0
        %v1390 = vadd.f32 %v1317, %v1389
        %v1391 = vpop.f32.mrf.mxu0
        %1392 = vmatprep.mubr.f32.mxu0 0.0
        %1393 = vmatmul.mubr.f32.gmra.mxu0 %v1283
        %v1394 = vpop.f32.mrf.mxu0
        %v1395 = vadd.f32 %v1317, %v1394
        %v1396 = vpop.f32.mrf.mxu0
        %1397 = vmatprep.mubr.f32.mxu0 0.0
        %1398 = vmatmul.mubr.f32.gmra.mxu0 %v1284
        %v1399 = vpop.f32.mrf.mxu0
        %v1400 = vadd.f32 %v1317, %v1399
        %v1401 = vpop.f32.mrf.mxu0
        %1402 = vmatprep.mubr.f32.mxu0 0.0
        %1403 = vmatmul.mubr.f32.gmra.mxu0 %v1285
        %v1404 = vpop.f32.mrf.mxu0
        %v1405 = vadd.f32 %v1317, %v1404
        %v1406 = vpop.f32.mrf.mxu0
        %1407 = vmatprep.mubr.f32.mxu0 0.0
        %1408 = vmatmul.mubr.f32.gmra.mxu0 %v1286
        %v1409 = vpop.f32.mrf.mxu0
        %v1410 = vadd.f32 %v1317, %v1409
        %v1411 = vpop.f32.mrf.mxu0
        %1412 = vmatprep.mubr.f32.mxu0 0.0
        %1413 = vmatmul.mubr.f32.gmra.mxu0 %v1287
        %v1414 = vpop.f32.mrf.mxu0
        %v1415 = vadd.f32 %v1317, %v1414
        %v1416 = vpop.f32.mrf.mxu0
        %1417 = vmatprep.mubr.f32.mxu0 0.0
        %1418 = vmatmul.mubr.f32.gmra.mxu0 %v1288
        %v1419 = vpop.f32.mrf.mxu0
        %v1420 = vadd.f32 %v1317, %v1419
        %v1421 = vpop.f32.mrf.mxu0
        %1422 = vmatprep.mubr.f32.mxu0 0.0
        %1423 = vmatmul.mubr.f32.gmra.mxu0 %v1289
        %v1424 = vpop.f32.mrf.mxu0
        %v1425 = vadd.f32 %v1317, %v1424
        %v1426 = vpop.f32.mrf.mxu0
        %1427 = vmatprep.mubr.f32.mxu0 0.0
        %1428 = vmatmul.mubr.f32.gmra.mxu0 %v1290
        %v1429 = vpop.f32.mrf.mxu0
        %v1430 = vadd.f32 %v1317, %v1429
        %v1431 = vpop.f32.mrf.mxu0
        %1432 = vmatprep.mubr.f32.mxu0 0.0
        %1433 = vmatmul.mubr.f32.gmra.mxu0 %v1291
        %v1434 = vpop.f32.mrf.mxu0
        %v1435 = vadd.f32 %v1317, %v1434
        %v1436 = vpop.f32.mrf.mxu0
        %1437 = vmatprep.mubr.f32.mxu0 0.0
        %1438 = vmatmul.mubr.f32.gmra.mxu0 %v1292
        %v1439 = vpop.f32.mrf.mxu0
        %v1440 = vadd.f32 %v1317, %v1439
        %v1441 = vpop.f32.mrf.mxu0
        %1442 = vmatprep.mubr.f32.mxu0 0.0
        %1443 = vmatmul.mubr.f32.gmra.mxu0 %v1293
        %v1444 = vpop.f32.mrf.mxu0
        %v1445 = vadd.f32 %v1317, %v1444
        %v1446 = vpop.f32.mrf.mxu0
        %1447 = vmatprep.mubr.f32.mxu0 0.0
        %1448 = vmatmul.mubr.f32.gmra.mxu0 %v1294
        %v1449 = vpop.f32.mrf.mxu0
        %v1450 = vadd.f32 %v1317, %v1449
        %v1451 = vpop.f32.mrf.mxu0
        %1452 = vmatprep.mubr.f32.mxu0 0.0
        %1453 = vmatmul.mubr.f32.gmra.mxu0 %v1295
        %v1454 = vpop.f32.mrf.mxu0
        %v1455 = vadd.f32 %v1317, %v1454
        %v1456 = vpop.f32.mrf.mxu0
        %1457 = vmatprep.mubr.f32.mxu0 0.0
        %1458 = vmatmul.mubr.f32.gmra.mxu0 %v1296
        %v1459 = vpop.f32.mrf.mxu0
        %v1460 = vadd.f32 %v1317, %v1459
        %v1461 = vpop.f32.mrf.mxu0
        %1462 = vdwg.mxu0
        %v1463 = vadd.f32 %v1037, %v1385
        %v1464 = vadd.f32 %v1042, %v1390
        %v1465 = vadd.f32 %v1047, %v1395
        %v1466 = vadd.f32 %v1052, %v1400
        %v1467 = vadd.f32 %v1057, %v1405
        %v1468 = vadd.f32 %v1062, %v1410
        %v1469 = vadd.f32 %v1067, %v1415
        %v1470 = vadd.f32 %v1072, %v1420
        %v1471 = vadd.f32 %v1077, %v1425
        %v1472 = vadd.f32 %v1082, %v1430
        %v1473 = vadd.f32 %v1087, %v1435
        %v1474 = vadd.f32 %v1092, %v1440
        %v1475 = vadd.f32 %v1097, %v1445
        %v1476 = vadd.f32 %v1102, %v1450
        %v1477 = vadd.f32 %v1107, %v1455
        %v1478 = vadd.f32 %v1112, %v1460
        %v1479 = vld [vmem:[#allocation2 + $0x308] sm:$0xff]
        %v1480 = vld [vmem:[#allocation2 + $0x310] sm:$0xff]
        %v1481 = vld [vmem:[#allocation2 + $0x318] sm:$0xff]
        %v1482 = vld [vmem:[#allocation2 + $0x320] sm:$0xff]
        %v1483 = vld [vmem:[#allocation2 + $0x328] sm:$0xff]
        %v1484 = vld [vmem:[#allocation2 + $0x330] sm:$0xff]
        %v1485 = vld [vmem:[#allocation2 + $0x338] sm:$0xff]
        %v1486 = vld [vmem:[#allocation2 + $0x340] sm:$0xff]
        %v1487 = vld [vmem:[#allocation2 + $0x348] sm:$0xff]
        %v1488 = vld [vmem:[#allocation2 + $0x350] sm:$0xff]
        %v1489 = vld [vmem:[#allocation2 + $0x358] sm:$0xff]
        %v1490 = vld [vmem:[#allocation2 + $0x360] sm:$0xff]
        %v1491 = vld [vmem:[#allocation2 + $0x368] sm:$0xff]
        %v1492 = vld [vmem:[#allocation2 + $0x370] sm:$0xff]
        %v1493 = vld [vmem:[#allocation2 + $0x378] sm:$0xff]
        %v1494 = vld [vmem:[#allocation2 + $0x380] sm:$0xff]
        %v1495 = vld [vmem:[%s2 + $0x7] sm:$0x1]
        %v1496 = vlaneseq
        %v1497 = vshrl.u32 %v1496, 7
        %v1498 = vsub.s32 0, %v1497
        %v1499 = vrot.slane %v1495, %v1498
        %1500 = vmatprep.subr.mxu0 0.0
        %1501 = vmatpush1.msra.mxu0 %v1494
        %1502 = vmatprep.subr.mxu0 0.0
        %1503 = vmatpush1.msra.mxu0 %v1493
        %1504 = vmatprep.subr.mxu0 0.0
        %1505 = vmatpush1.msra.mxu0 %v1492
        %1506 = vmatprep.subr.mxu0 0.0
        %1507 = vmatpush1.msra.mxu0 %v1491
        %1508 = vmatprep.subr.mxu0 0.0
        %1509 = vmatpush1.msra.mxu0 %v1490
        %1510 = vmatprep.subr.mxu0 0.0
        %1511 = vmatpush1.msra.mxu0 %v1489
        %1512 = vmatprep.subr.mxu0 0.0
        %1513 = vmatpush1.msra.mxu0 %v1488
        %1514 = vmatprep.subr.mxu0 0.0
        %1515 = vmatpush1.msra.mxu0 %v1487
        %1516 = vmatprep.subr.mxu0 0.0
        %1517 = vmatpush1.msra.mxu0 %v1486
        %1518 = vmatprep.subr.mxu0 0.0
        %1519 = vmatpush1.msra.mxu0 %v1485
        %1520 = vmatprep.subr.mxu0 0.0
        %1521 = vmatpush1.msra.mxu0 %v1484
        %1522 = vmatprep.subr.mxu0 0.0
        %1523 = vmatpush1.msra.mxu0 %v1483
        %1524 = vmatprep.subr.mxu0 0.0
        %1525 = vmatpush1.msra.mxu0 %v1482
        %1526 = vmatprep.subr.mxu0 0.0
        %1527 = vmatpush1.msra.mxu0 %v1481
        %1528 = vmatprep.subr.mxu0 0.0
        %1529 = vmatpush1.msra.mxu0 %v1480
        %1530 = vmatprep.subr.mxu0 0.0
        %1531 = vmatpush1.msra.mxu0 %v1479
        %1532 = vmatprep.subr.mxu0 0.0
        %1533 = vmatpush2.msra.mxu0 0.0
        %1534 = vmatprep.subr.mxu0 0.0
        %1535 = vmatpush2.msra.mxu0 0.0
        %1536 = vmatprep.subr.mxu0 0.0
        %1537 = vmatpush2.msra.mxu0 0.0
        %1538 = vmatprep.subr.mxu0 0.0
        %1539 = vmatpush2.msra.mxu0 0.0
        %1540 = vmatprep.subr.mxu0 0.0
        %1541 = vmatpush2.msra.mxu0 0.0
        %1542 = vmatprep.subr.mxu0 0.0
        %1543 = vmatpush2.msra.mxu0 0.0
        %1544 = vmatprep.subr.mxu0 0.0
        %1545 = vmatpush2.msra.mxu0 0.0
        %1546 = vmatprep.subr.mxu0 0.0
        %1547 = vmatpush2.msra.mxu0 0.0
        %1548 = vmatprep.subr.mxu0 0.0
        %1549 = vmatpush2.msra.mxu0 0.0
        %1550 = vmatprep.subr.mxu0 0.0
        %1551 = vmatpush2.msra.mxu0 0.0
        %1552 = vmatprep.subr.mxu0 0.0
        %1553 = vmatpush2.msra.mxu0 0.0
        %1554 = vmatprep.subr.mxu0 0.0
        %1555 = vmatpush2.msra.mxu0 0.0
        %1556 = vmatprep.subr.mxu0 0.0
        %1557 = vmatpush2.msra.mxu0 0.0
        %1558 = vmatprep.subr.mxu0 0.0
        %1559 = vmatpush2.msra.mxu0 0.0
        %1560 = vmatprep.subr.mxu0 0.0
        %1561 = vmatpush2.msra.mxu0 0.0
        %1562 = vmatprep.subr.mxu0 0.0
        %1563 = vmatpush2.msra.mxu0 0.0
        %1564 = vmatprep.mubr.f32.mxu0 0.0
        %1565 = vmatmul.mubr.f32.gmra.mxu0 %v1463
        %v1566 = vpop.f32.mrf.mxu0
        %v1567 = vadd.f32 %v1499, %v1566
        %v1568 = vpop.f32.mrf.mxu0
        %1569 = vmatprep.mubr.f32.mxu0 0.0
        %1570 = vmatmul.mubr.f32.gmra.mxu0 %v1464
        %v1571 = vpop.f32.mrf.mxu0
        %v1572 = vadd.f32 %v1499, %v1571
        %v1573 = vpop.f32.mrf.mxu0
        %1574 = vmatprep.mubr.f32.mxu0 0.0
        %1575 = vmatmul.mubr.f32.gmra.mxu0 %v1465
        %v1576 = vpop.f32.mrf.mxu0
        %v1577 = vadd.f32 %v1499, %v1576
        %v1578 = vpop.f32.mrf.mxu0
        %1579 = vmatprep.mubr.f32.mxu0 0.0
        %1580 = vmatmul.mubr.f32.gmra.mxu0 %v1466
        %v1581 = vpop.f32.mrf.mxu0
        %v1582 = vadd.f32 %v1499, %v1581
        %v1583 = vpop.f32.mrf.mxu0
        %1584 = vmatprep.mubr.f32.mxu0 0.0
        %1585 = vmatmul.mubr.f32.gmra.mxu0 %v1467
        %v1586 = vpop.f32.mrf.mxu0
        %v1587 = vadd.f32 %v1499, %v1586
        %v1588 = vpop.f32.mrf.mxu0
        %1589 = vmatprep.mubr.f32.mxu0 0.0
        %1590 = vmatmul.mubr.f32.gmra.mxu0 %v1468
        %v1591 = vpop.f32.mrf.mxu0
        %v1592 = vadd.f32 %v1499, %v1591
        %v1593 = vpop.f32.mrf.mxu0
        %1594 = vmatprep.mubr.f32.mxu0 0.0
        %1595 = vmatmul.mubr.f32.gmra.mxu0 %v1469
        %v1596 = vpop.f32.mrf.mxu0
        %v1597 = vadd.f32 %v1499, %v1596
        %v1598 = vpop.f32.mrf.mxu0
        %1599 = vmatprep.mubr.f32.mxu0 0.0
        %1600 = vmatmul.mubr.f32.gmra.mxu0 %v1470
        %v1601 = vpop.f32.mrf.mxu0
        %v1602 = vadd.f32 %v1499, %v1601
        %v1603 = vpop.f32.mrf.mxu0
        %1604 = vmatprep.mubr.f32.mxu0 0.0
        %1605 = vmatmul.mubr.f32.gmra.mxu0 %v1471
        %v1606 = vpop.f32.mrf.mxu0
        %v1607 = vadd.f32 %v1499, %v1606
        %v1608 = vpop.f32.mrf.mxu0
        %1609 = vmatprep.mubr.f32.mxu0 0.0
        %1610 = vmatmul.mubr.f32.gmra.mxu0 %v1472
        %v1611 = vpop.f32.mrf.mxu0
        %v1612 = vadd.f32 %v1499, %v1611
        %v1613 = vpop.f32.mrf.mxu0
        %1614 = vmatprep.mubr.f32.mxu0 0.0
        %1615 = vmatmul.mubr.f32.gmra.mxu0 %v1473
        %v1616 = vpop.f32.mrf.mxu0
        %v1617 = vadd.f32 %v1499, %v1616
        %v1618 = vpop.f32.mrf.mxu0
        %1619 = vmatprep.mubr.f32.mxu0 0.0
        %1620 = vmatmul.mubr.f32.gmra.mxu0 %v1474
        %v1621 = vpop.f32.mrf.mxu0
        %v1622 = vadd.f32 %v1499, %v1621
        %v1623 = vpop.f32.mrf.mxu0
        %1624 = vmatprep.mubr.f32.mxu0 0.0
        %1625 = vmatmul.mubr.f32.gmra.mxu0 %v1475
        %v1626 = vpop.f32.mrf.mxu0
        %v1627 = vadd.f32 %v1499, %v1626
        %v1628 = vpop.f32.mrf.mxu0
        %1629 = vmatprep.mubr.f32.mxu0 0.0
        %1630 = vmatmul.mubr.f32.gmra.mxu0 %v1476
        %v1631 = vpop.f32.mrf.mxu0
        %v1632 = vadd.f32 %v1499, %v1631
        %v1633 = vpop.f32.mrf.mxu0
        %1634 = vmatprep.mubr.f32.mxu0 0.0
        %1635 = vmatmul.mubr.f32.gmra.mxu0 %v1477
        %v1636 = vpop.f32.mrf.mxu0
        %v1637 = vadd.f32 %v1499, %v1636
        %v1638 = vpop.f32.mrf.mxu0
        %1639 = vmatprep.mubr.f32.mxu0 0.0
        %1640 = vmatmul.mubr.f32.gmra.mxu0 %v1478
        %v1641 = vpop.f32.mrf.mxu0
        %v1642 = vadd.f32 %v1499, %v1641
        %v1643 = vpop.f32.mrf.mxu0
        %1644 = vdwg.mxu0
        %v1645 = vmax.f32 %v1567, 0.0
        %v1646 = vmax.f32 %v1572, 0.0
        %v1647 = vmax.f32 %v1577, 0.0
        %v1648 = vmax.f32 %v1582, 0.0
        %v1649 = vmax.f32 %v1587, 0.0
        %v1650 = vmax.f32 %v1592, 0.0
        %v1651 = vmax.f32 %v1597, 0.0
        %v1652 = vmax.f32 %v1602, 0.0
        %v1653 = vmax.f32 %v1607, 0.0
        %v1654 = vmax.f32 %v1612, 0.0
        %v1655 = vmax.f32 %v1617, 0.0
        %v1656 = vmax.f32 %v1622, 0.0
        %v1657 = vmax.f32 %v1627, 0.0
        %v1658 = vmax.f32 %v1632, 0.0
        %v1659 = vmax.f32 %v1637, 0.0
        %v1660 = vmax.f32 %v1642, 0.0
        %1661 = vst [vmem:[%s179] sm:$0xff] %v1645
        %1662 = vst [vmem:[%s179 + $0x8] sm:$0xff] %v1646
        %1663 = vst [vmem:[%s179 + $0x10] sm:$0xff] %v1647
        %1664 = vst [vmem:[%s179 + $0x18] sm:$0xff] %v1648
        %1665 = vst [vmem:[%s179 + $0x20] sm:$0xff] %v1649
        %1666 = vst [vmem:[%s179 + $0x28] sm:$0xff] %v1650
        %1667 = vst [vmem:[%s179 + $0x30] sm:$0xff] %v1651
        %1668 = vst [vmem:[%s179 + $0x38] sm:$0xff] %v1652
        %1669 = vst [vmem:[%s179 + $0x40] sm:$0xff] %v1653
        %1670 = vst [vmem:[%s179 + $0x48] sm:$0xff] %v1654
        %1671 = vst [vmem:[%s179 + $0x50] sm:$0xff] %v1655
        %1672 = vst [vmem:[%s179 + $0x58] sm:$0xff] %v1656
        %1673 = vst [vmem:[%s179 + $0x60] sm:$0xff] %v1657
        %1674 = vst [vmem:[%s179 + $0x68] sm:$0xff] %v1658
        %1675 = vst [vmem:[%s179 + $0x70] sm:$0xff] %v1659
        %1676 = vst [vmem:[%s179 + $0x78] sm:$0xff] %v1660
        %s1677 = sand.u32 %s94, 1
        %s1678 = scalar_lea.sflag [#allocation4], %s1677
        %s1679 = sand.u32 %s94, 1
        %s1680 = smul.addr %s1679, 128
        %s1681 = scalar_lea.vmem [#allocation5], %s1680
        // Predicated region
        $region37: #{tpu_custom_call.1} parent=31 // pred_check
          %p1682 = pneg %p104
        $region38: #{tpu_custom_call.1} parent=31 // pred_check_branch
          %1684 = sbr.rel (%p1682) target = $region40
        $region39: #{tpu_custom_call.1} parent=31 // pred_region
          %s1685 = smul.u32 16, %s18
          %s1687 = ssub.s32 2048, 2048
          %1688 = vsyncadd %s1678, %s1687
          %s1689 = smul.addr %s1685, 128
          %s1690 = scalar_lea.hbm %s3, %s1689
          %s1691 = sshll.u32 %s1681, 4
          %s1692 = int_to_ptr.vmem [resolvable:$true] %s1691
          %1697 = dma.vmem_to_hbm [thread:$0]  %s1692, 2048, %s1690, %s1678, 128, 128, 8
        $region40: #{tpu_custom_call.1} parent=31 // pred_fallthru
          _
      $region32: #{tpu_custom_call.1} parent=5 // pred_fallthru
        _
      %p1698 = scmp.le.s32.totalorder 2, %s13
      // Predicated region
      $region41: #{tpu_custom_call.1} parent=5 // pred_check
        %p1699 = pneg %p1698
      $region42: #{tpu_custom_call.1} parent=5 // pred_check_branch
        %1701 = sbr.rel (%p1699) target = $region44
      $region43: #{tpu_custom_call.1} parent=5 // pred_region
        %s1702 = ssub.s32 %s13, 2
        // Predicated region
        $region45: #{tpu_custom_call.1} parent=43 // pred_check
          %p1703 = pneg %p110
        $region46: #{tpu_custom_call.1} parent=43 // pred_check_branch
          %1705 = sbr.rel (%p1703) target = $region48
        $region47: #{tpu_custom_call.1} parent=43 // pred_region
          %s1706 = sand.u32 %s95, 1
          %s1707 = scalar_lea.sflag [#allocation4], %s1706
          %s1708 = sand.u32 %s95, 1
          %s1709 = smul.addr %s1708, 128
          %s1710 = scalar_lea.vmem [#allocation5], %s1709
          %1711 = dma.done %s1707, 2048
        $region48: #{tpu_custom_call.1} parent=43 // pred_fallthru
          _
      $region44: #{tpu_custom_call.1} parent=5 // pred_fallthru
        _
    $region6: #{tpu_custom_call.1} parent=1 // loop_footer
      %s17 = sadd.s32 1, %s13
    $region7: #{tpu_custom_call.1} parent=1 // loop_footer_branch
      %12 = sbr.rel target = $region3
    $region8: #{tpu_custom_call.1} parent=1 // loop_exit
      _
    %1712 = vsyncpa [#allocation3], 1
    %s1713 = scalar_lea.sflag [#allocation3], 1
    %1714 = vsyncpa %s1713, 1
    %1715 = vsyncpa [#allocation4], 1
    %s1716 = scalar_lea.sflag [#allocation4], 1
    %1717 = vsyncpa %s1716, 1

</llo_original>
